<compile_context>
chip_gen: v5e
topology: v5e:2x2
jax: 0.10.0
libtpu: 0.0.40
codegen_flags: <defaults>
</compile_context>

<pallas_src>
import jax
import jax.numpy as jnp
from jax.experimental import pallas as pl
from jax.experimental.pallas import tpu as pltpu

# ------------------------- model hyper-parameters -------------------------
BATCH = 2
LATENT_DIM = 8
HIDDEN_DIM = 32
OUTPUT_DIM = 16
SEQ_LEN = 8
NUM_LAYERS = 2  # fixed to 2 in the kernel (matches default num_layers=2)


# ------------------------------- kernel -----------------------------------
def motion_decoder_kernel(
    z_ref,        # [B, L]
    w_init_ref,   # [L, H]
    b_init_ref,   # [1, H]
    w_ih0_ref,    # [H, 4H]     layer-0 input weights
    w_hh0_ref,    # [H, 4H]     layer-0 recurrent weights
    b0_ref,       # [1, 4H]     layer-0 bias (bias_ih + bias_hh)
    w1_ref,       # [2H, 4H]    layer-1 fused [W_ih1; W_hh1]
    b1_ref,       # [1, 4H]     layer-1 bias (bias_ih + bias_hh)
    w_fc1_ref,    # [H, H]
    b_fc1_ref,    # [1, H]
    w_fc2_ref,    # [H, O]
    b_fc2_ref,    # [1, O]
    out_ref,      # [T*B, O]    single lane-contiguous output block
    h1_all_ref,   # scratch VMEM [T*B, H]  per-step layer-1 hidden states
    state_ref,    # scratch VMEM [B, 2H]   packed (h0, h1) for fused layer-1 dot
):
    H = HIDDEN_DIM
    T = SEQ_LEN
    B = z_ref.shape[0]

    z = z_ref[...]
    h_init = (
        jnp.dot(z, w_init_ref[...], preferred_element_type=jnp.float32)
        + b_init_ref[...]
    )                                                    # [B, H]

    # Hoisted, time-invariant layer-0 input projection (x_t == h_init forall t).
    xw0 = (
        jnp.dot(h_init, w_ih0_ref[...], preferred_element_type=jnp.float32)
        + b0_ref[...]
    )                                                    # [B, 4H]

    w_hh0 = w_hh0_ref[...]
    w1 = w1_ref[...]
    b1 = b1_ref[...]

    h0 = h_init
    c0 = jnp.zeros_like(h_init)
    h1 = h_init
    c1 = jnp.zeros_like(h_init)

    # Fully unrolled time loop (T is a small static constant).
    for t in range(T):
        # ----- layer 0: only the recurrent matmul per step -----
        g0 = jnp.dot(h0, w_hh0, preferred_element_type=jnp.float32) + xw0  # [B,4H]
        sig0 = jax.nn.sigmoid(g0)        # full-width EUP op over 4H = 128 lanes
        tnh0 = jnp.tanh(g0)
        i0 = sig0[:, 0 * H:1 * H]
        f0 = sig0[:, 1 * H:2 * H]
        gg0 = tnh0[:, 2 * H:3 * H]
        o0 = sig0[:, 3 * H:4 * H]
        c0 = f0 * c0 + i0 * gg0
        h0 = o0 * jnp.tanh(c0)

        # ----- layer 1: fused (input || hidden) matmul via resident scratch -----
        state_ref[:, 0:H] = h0
        state_ref[:, H:2 * H] = h1
        g1 = (
            jnp.dot(state_ref[...], w1, preferred_element_type=jnp.float32) + b1
        )                                                 # [B, 4H]
        sig1 = jax.nn.sigmoid(g1)
        tnh1 = jnp.tanh(g1)
        i1 = sig1[:, 0 * H:1 * H]
        f1 = sig1[:, 1 * H:2 * H]
        gg1 = tnh1[:, 2 * H:3 * H]
        o1 = sig1[:, 3 * H:4 * H]
        c1 = f1 * c1 + i1 * gg1
        h1 = o1 * jnp.tanh(c1)

        # Stash layer-1 output for the batched MLP after the loop (static slice).
        h1_all_ref[t * B:(t + 1) * B, :] = h1

    # ----- output MLP hoisted out of the time loop: one pass over [T*B, H] -----
    x_all = h1_all_ref[...]                               # [T*B, H]
    hid = jnp.maximum(
        jnp.dot(x_all, w_fc1_ref[...], preferred_element_type=jnp.float32)
        + b_fc1_ref[...],
        0.0,
    )
    y = (
        jnp.dot(hid, w_fc2_ref[...], preferred_element_type=jnp.float32)
        + b_fc2_ref[...]
    )                                                     # [T*B, O]
    out_ref[...] = y.astype(out_ref.dtype)                # single store


# ------------------------------- wrapper -----------------------------------
def motion_decoder(z, params):
    (w_init, b_init, w_ih, w_hh, b_lstm, w_fc1, b_fc1, w_fc2, b_fc2) = params
    B = z.shape[0]

    # Host-side weight prep: split layer 0, fuse layer-1 input+recurrent weights.
    w_ih0 = w_ih[0]                                       # [H, 4H]
    w_hh0 = w_hh[0]                                       # [H, 4H]
    b0 = b_lstm[0]                                        # [1, 4H]
    w1 = jnp.concatenate([w_ih[1], w_hh[1]], axis=0)      # [2H, 4H]
    b1 = b_lstm[1]                                        # [1, 4H]

    out_flat = pl.pallas_call(
        motion_decoder_kernel,
        out_shape=jax.ShapeDtypeStruct((SEQ_LEN * B, OUTPUT_DIM), jnp.float32),
        in_specs=[pl.BlockSpec(memory_space=pltpu.MemorySpace.VMEM)] * 12,
        out_specs=pl.BlockSpec(memory_space=pltpu.MemorySpace.VMEM),
        scratch_shapes=[
            pltpu.VMEM((SEQ_LEN * B, HIDDEN_DIM), jnp.float32),  # h1 history
            pltpu.VMEM((B, 2 * HIDDEN_DIM), jnp.float32),        # packed state
        ],
    )(z, w_init, b_init, w_ih0, w_hh0, b0, w1, b1, w_fc1, b_fc1, w_fc2, b_fc2)

    # [T*B, O] with row = t*B + b  ->  [B, T, O]
    return out_flat.reshape(SEQ_LEN, B, OUTPUT_DIM).transpose(1, 0, 2)


# --------------------------- pure-JAX reference -----------------------------
def motion_decoder_ref(z, params):
    (w_init, b_init, w_ih, w_hh, b_lstm, w_fc1, b_fc1, w_fc2, b_fc2) = params
    H = HIDDEN_DIM
    h_init = z @ w_init + b_init
    x = h_init

    def cell(x_in, h, c, layer):
        gates = x_in @ w_ih[layer] + h @ w_hh[layer] + b_lstm[layer]
        i = jax.nn.sigmoid(gates[:, :H])
        f = jax.nn.sigmoid(gates[:, H:2 * H])
        g = jnp.tanh(gates[:, 2 * H:3 * H])
        o = jax.nn.sigmoid(gates[:, 3 * H:])
        c_new = f * c + i * g
        return o * jnp.tanh(c_new), c_new

    h0, c0, h1, c1 = h_init, jnp.zeros_like(h_init), h_init, jnp.zeros_like(h_init)
    outs = []
    for _ in range(SEQ_LEN):
        h0, c0 = cell(x, h0, c0, 0)
        h1, c1 = cell(h0, h1, c1, 1)
        hid = jnp.maximum(h1 @ w_fc1 + b_fc1, 0.0)
        outs.append(hid @ w_fc2 + b_fc2)
    return jnp.stack(outs, axis=1)


# ------------------------------ param init ----------------------------------
def init_params(key):
    ks = jax.random.split(key, 9)
    s = 0.1
    w_init = s * jax.random.normal(ks[0], (LATENT_DIM, HIDDEN_DIM), jnp.float32)
    b_init = s * jax.random.normal(ks[1], (1, HIDDEN_DIM), jnp.float32)
    w_ih = s * jax.random.normal(ks[2], (NUM_LAYERS, HIDDEN_DIM, 4 * HIDDEN_DIM), jnp.float32)
    w_hh = s * jax.random.normal(ks[3], (NUM_LAYERS, HIDDEN_DIM, 4 * HIDDEN_DIM), jnp.float32)
    b_lstm = s * jax.random.normal(ks[4], (NUM_LAYERS, 1, 4 * HIDDEN_DIM), jnp.float32)
    w_fc1 = s * jax.random.normal(ks[5], (HIDDEN_DIM, HIDDEN_DIM), jnp.float32)
    b_fc1 = s * jax.random.normal(ks[6], (1, HIDDEN_DIM), jnp.float32)
    w_fc2 = s * jax.random.normal(ks[7], (HIDDEN_DIM, OUTPUT_DIM), jnp.float32)
    b_fc2 = s * jax.random.normal(ks[8], (1, OUTPUT_DIM), jnp.float32)
    return (w_init, b_init, w_ih, w_hh, b_lstm, w_fc1, b_fc1, w_fc2, b_fc2)


# --------------------------------- main --------------------------------------
if __name__ == "__main__":
    key = jax.random.PRNGKey(0)
    kz, kp = jax.random.split(key)
    z = jax.random.normal(kz, (BATCH, LATENT_DIM), jnp.float32)
    params = init_params(kp)

    # NOTE: dropout layers are identity in eval/inference mode (as in PyTorch .eval()).
    out = jax.block_until_ready(motion_decoder(z, params))
    assert out.shape == (BATCH, SEQ_LEN, OUTPUT_DIM), out.shape

    ref = motion_decoder_ref(z, params)
    assert jnp.allclose(out, ref, atol=1e-4, rtol=1e-4), float(jnp.abs(out - ref).max())

    print("KERNEL_OK")
</pallas_src>

<mosaic_0001>
module attributes {stable_mosaic.version = 11 : i64} {
  func.func @motion_decoder_kernel(%arg0: memref<2x8xf32, #tpu.memory_space<vmem>>, %arg1: memref<8x32xf32, #tpu.memory_space<vmem>>, %arg2: memref<1x32xf32, #tpu.memory_space<vmem>>, %arg3: memref<32x128xf32, #tpu.memory_space<vmem>>, %arg4: memref<32x128xf32, #tpu.memory_space<vmem>>, %arg5: memref<1x128xf32, #tpu.memory_space<vmem>>, %arg6: memref<64x128xf32, #tpu.memory_space<vmem>>, %arg7: memref<1x128xf32, #tpu.memory_space<vmem>>, %arg8: memref<32x32xf32, #tpu.memory_space<vmem>>, %arg9: memref<1x32xf32, #tpu.memory_space<vmem>>, %arg10: memref<32x16xf32, #tpu.memory_space<vmem>>, %arg11: memref<1x16xf32, #tpu.memory_space<vmem>>, %arg12: memref<16x16xf32, #tpu.memory_space<vmem>>, %arg13: memref<16x32xf32, #tpu.memory_space<vmem>>, %arg14: memref<2x64xf32, #tpu.memory_space<vmem>>) attributes {dimension_semantics = [], scalar_prefetch = 0 : i64, scratch_operands = 2 : i64, tpu.core_type = #tpu.core_type<tc>} {
    %c0 = arith.constant 0 : index
    %c0_0 = arith.constant 0 : index
    %0 = vector.load %arg0[%c0, %c0_0] : memref<2x8xf32, #tpu.memory_space<vmem>>, vector<2x8xf32>
    %c0_1 = arith.constant 0 : index
    %c0_2 = arith.constant 0 : index
    %1 = vector.load %arg1[%c0_1, %c0_2] : memref<8x32xf32, #tpu.memory_space<vmem>>, vector<8x32xf32>
    %cst = arith.constant dense<0.000000e+00> : vector<2x32xf32>
    %2 = tpu.matmul %0, %1, %cst {dimension_numbers = #tpu.dot_dimension_numbers<[1], [0], [0], [1], [0, 0, 1, 1], [], []>} : vector<2x8xf32>, vector<8x32xf32>, vector<2x32xf32> -> vector<2x32xf32>
    %c0_3 = arith.constant 0 : index
    %c0_4 = arith.constant 0 : index
    %3 = vector.load %arg2[%c0_3, %c0_4] : memref<1x32xf32, #tpu.memory_space<vmem>>, vector<1x32xf32>
    %4 = vector.broadcast %3 : vector<1x32xf32> to vector<2x32xf32>
    %5 = arith.addf %2, %4 : vector<2x32xf32>
    %c0_5 = arith.constant 0 : index
    %c0_6 = arith.constant 0 : index
    %6 = vector.load %arg3[%c0_5, %c0_6] : memref<32x128xf32, #tpu.memory_space<vmem>>, vector<32x128xf32>
    %cst_7 = arith.constant dense<0.000000e+00> : vector<2x128xf32>
    %7 = tpu.matmul %5, %6, %cst_7 {dimension_numbers = #tpu.dot_dimension_numbers<[1], [0], [0], [1], [0, 0, 1, 1], [], []>} : vector<2x32xf32>, vector<32x128xf32>, vector<2x128xf32> -> vector<2x128xf32>
    %c0_8 = arith.constant 0 : index
    %c0_9 = arith.constant 0 : index
    %8 = vector.load %arg5[%c0_8, %c0_9] : memref<1x128xf32, #tpu.memory_space<vmem>>, vector<1x128xf32>
    %9 = vector.broadcast %8 : vector<1x128xf32> to vector<2x128xf32>
    %10 = arith.addf %7, %9 : vector<2x128xf32>
    %c0_10 = arith.constant 0 : index
    %c0_11 = arith.constant 0 : index
    %11 = vector.load %arg4[%c0_10, %c0_11] : memref<32x128xf32, #tpu.memory_space<vmem>>, vector<32x128xf32>
    %c0_12 = arith.constant 0 : index
    %c0_13 = arith.constant 0 : index
    %12 = vector.load %arg6[%c0_12, %c0_13] : memref<64x128xf32, #tpu.memory_space<vmem>>, vector<64x128xf32>
    %c0_14 = arith.constant 0 : index
    %c0_15 = arith.constant 0 : index
    %13 = vector.load %arg7[%c0_14, %c0_15] : memref<1x128xf32, #tpu.memory_space<vmem>>, vector<1x128xf32>
    %cst_16 = arith.constant 0.000000e+00 : f32
    %14 = vector.broadcast %cst_16 : f32 to vector<2x32xf32>
    %cst_17 = arith.constant 0.000000e+00 : f32
    %15 = vector.broadcast %cst_17 : f32 to vector<2x32xf32>
    %cst_18 = arith.constant dense<0.000000e+00> : vector<2x128xf32>
    %16 = tpu.matmul %5, %11, %cst_18 {dimension_numbers = #tpu.dot_dimension_numbers<[1], [0], [0], [1], [0, 0, 1, 1], [], []>} : vector<2x32xf32>, vector<32x128xf32>, vector<2x128xf32> -> vector<2x128xf32>
    %17 = arith.addf %16, %10 : vector<2x128xf32>
    %18 = arith.negf %17 : vector<2x128xf32>
    %19 = math.exp %18 : vector<2x128xf32>
    %cst_19 = arith.constant 1.000000e+00 : f32
    %20 = vector.broadcast %cst_19 : f32 to vector<2x128xf32>
    %21 = arith.addf %20, %19 : vector<2x128xf32>
    %22 = arith.divf %20, %21 : vector<2x128xf32>
    %23 = math.tanh %17 : vector<2x128xf32>
    %24 = vector.extract_strided_slice %22 {offsets = [0, 0], sizes = [2, 32], strides = [1, 1]} : vector<2x128xf32> to vector<2x32xf32>
    %25 = vector.extract_strided_slice %22 {offsets = [0, 32], sizes = [2, 32], strides = [1, 1]} : vector<2x128xf32> to vector<2x32xf32>
    %26 = vector.extract_strided_slice %23 {offsets = [0, 64], sizes = [2, 32], strides = [1, 1]} : vector<2x128xf32> to vector<2x32xf32>
    %27 = vector.extract_strided_slice %22 {offsets = [0, 96], sizes = [2, 32], strides = [1, 1]} : vector<2x128xf32> to vector<2x32xf32>
    %28 = arith.mulf %25, %14 : vector<2x32xf32>
    %29 = arith.mulf %24, %26 : vector<2x32xf32>
    %30 = arith.addf %28, %29 : vector<2x32xf32>
    %31 = math.tanh %30 : vector<2x32xf32>
    %32 = arith.mulf %27, %31 : vector<2x32xf32>
    %c0_20 = arith.constant 0 : index
    %c0_21 = arith.constant 0 : index
    %33 = vector.load %arg14[%c0_20, %c0_21] : memref<2x64xf32, #tpu.memory_space<vmem>>, vector<2x32xf32>
    tpu.vector_store %arg14[%c0_20, %c0_21], %32 {strides = array<i32>} : memref<2x64xf32, #tpu.memory_space<vmem>>, vector<2x32xf32>,
    %c0_22 = arith.constant 0 : index
    %c32 = arith.constant 32 : index
    %34 = vector.load %arg14[%c0_22, %c32] : memref<2x64xf32, #tpu.memory_space<vmem>>, vector<2x32xf32>
    tpu.vector_store %arg14[%c0_22, %c32], %5 {strides = array<i32>} : memref<2x64xf32, #tpu.memory_space<vmem>>, vector<2x32xf32>,
    %c0_23 = arith.constant 0 : index
    %c0_24 = arith.constant 0 : index
    %35 = vector.load %arg14[%c0_23, %c0_24] : memref<2x64xf32, #tpu.memory_space<vmem>>, vector<2x64xf32>
    %cst_25 = arith.constant dense<0.000000e+00> : vector<2x128xf32>
    %36 = tpu.matmul %35, %12, %cst_25 {dimension_numbers = #tpu.dot_dimension_numbers<[1], [0], [0], [1], [0, 0, 1, 1], [], []>} : vector<2x64xf32>, vector<64x128xf32>, vector<2x128xf32> -> vector<2x128xf32>
    %37 = vector.broadcast %13 : vector<1x128xf32> to vector<2x128xf32>
    %38 = arith.addf %36, %37 : vector<2x128xf32>
    %39 = arith.negf %38 : vector<2x128xf32>
    %40 = math.exp %39 : vector<2x128xf32>
    %cst_26 = arith.constant 1.000000e+00 : f32
    %41 = vector.broadcast %cst_26 : f32 to vector<2x128xf32>
    %42 = arith.addf %41, %40 : vector<2x128xf32>
    %43 = arith.divf %41, %42 : vector<2x128xf32>
    %44 = math.tanh %38 : vector<2x128xf32>
    %45 = vector.extract_strided_slice %43 {offsets = [0, 0], sizes = [2, 32], strides = [1, 1]} : vector<2x128xf32> to vector<2x32xf32>
    %46 = vector.extract_strided_slice %43 {offsets = [0, 32], sizes = [2, 32], strides = [1, 1]} : vector<2x128xf32> to vector<2x32xf32>
    %47 = vector.extract_strided_slice %44 {offsets = [0, 64], sizes = [2, 32], strides = [1, 1]} : vector<2x128xf32> to vector<2x32xf32>
    %48 = vector.extract_strided_slice %43 {offsets = [0, 96], sizes = [2, 32], strides = [1, 1]} : vector<2x128xf32> to vector<2x32xf32>
    %49 = arith.mulf %46, %15 : vector<2x32xf32>
    %50 = arith.mulf %45, %47 : vector<2x32xf32>
    %51 = arith.addf %49, %50 : vector<2x32xf32>
    %52 = math.tanh %51 : vector<2x32xf32>
    %53 = arith.mulf %48, %52 : vector<2x32xf32>
    %c0_27 = arith.constant 0 : index
    %c0_28 = arith.constant 0 : index
    %54 = vector.load %arg13[%c0_27, %c0_28] : memref<16x32xf32, #tpu.memory_space<vmem>>, vector<2x32xf32>
    tpu.vector_store %arg13[%c0_27, %c0_28], %53 {strides = array<i32>} : memref<16x32xf32, #tpu.memory_space<vmem>>, vector<2x32xf32>,
    %cst_29 = arith.constant dense<0.000000e+00> : vector<2x128xf32>
    %55 = tpu.matmul %32, %11, %cst_29 {dimension_numbers = #tpu.dot_dimension_numbers<[1], [0], [0], [1], [0, 0, 1, 1], [], []>} : vector<2x32xf32>, vector<32x128xf32>, vector<2x128xf32> -> vector<2x128xf32>
    %56 = arith.addf %55, %10 : vector<2x128xf32>
    %57 = arith.negf %56 : vector<2x128xf32>
    %58 = math.exp %57 : vector<2x128xf32>
    %cst_30 = arith.constant 1.000000e+00 : f32
    %59 = vector.broadcast %cst_30 : f32 to vector<2x128xf32>
    %60 = arith.addf %59, %58 : vector<2x128xf32>
    %61 = arith.divf %59, %60 : vector<2x128xf32>
    %62 = math.tanh %56 : vector<2x128xf32>
    %63 = vector.extract_strided_slice %61 {offsets = [0, 0], sizes = [2, 32], strides = [1, 1]} : vector<2x128xf32> to vector<2x32xf32>
    %64 = vector.extract_strided_slice %61 {offsets = [0, 32], sizes = [2, 32], strides = [1, 1]} : vector<2x128xf32> to vector<2x32xf32>
    %65 = vector.extract_strided_slice %62 {offsets = [0, 64], sizes = [2, 32], strides = [1, 1]} : vector<2x128xf32> to vector<2x32xf32>
    %66 = vector.extract_strided_slice %61 {offsets = [0, 96], sizes = [2, 32], strides = [1, 1]} : vector<2x128xf32> to vector<2x32xf32>
    %67 = arith.mulf %64, %30 : vector<2x32xf32>
    %68 = arith.mulf %63, %65 : vector<2x32xf32>
    %69 = arith.addf %67, %68 : vector<2x32xf32>
    %70 = math.tanh %69 : vector<2x32xf32>
    %71 = arith.mulf %66, %70 : vector<2x32xf32>
    %c0_31 = arith.constant 0 : index
    %c0_32 = arith.constant 0 : index
    %72 = vector.load %arg14[%c0_31, %c0_32] : memref<2x64xf32, #tpu.memory_space<vmem>>, vector<2x32xf32>
    tpu.vector_store %arg14[%c0_31, %c0_32], %71 {strides = array<i32>} : memref<2x64xf32, #tpu.memory_space<vmem>>, vector<2x32xf32>,
    %c0_33 = arith.constant 0 : index
    %c32_34 = arith.constant 32 : index
    %73 = vector.load %arg14[%c0_33, %c32_34] : memref<2x64xf32, #tpu.memory_space<vmem>>, vector<2x32xf32>
    tpu.vector_store %arg14[%c0_33, %c32_34], %53 {strides = array<i32>} : memref<2x64xf32, #tpu.memory_space<vmem>>, vector<2x32xf32>,
    %c0_35 = arith.constant 0 : index
    %c0_36 = arith.constant 0 : index
    %74 = vector.load %arg14[%c0_35, %c0_36] : memref<2x64xf32, #tpu.memory_space<vmem>>, vector<2x64xf32>
    %cst_37 = arith.constant dense<0.000000e+00> : vector<2x128xf32>
    %75 = tpu.matmul %74, %12, %cst_37 {dimension_numbers = #tpu.dot_dimension_numbers<[1], [0], [0], [1], [0, 0, 1, 1], [], []>} : vector<2x64xf32>, vector<64x128xf32>, vector<2x128xf32> -> vector<2x128xf32>
    %76 = vector.broadcast %13 : vector<1x128xf32> to vector<2x128xf32>
    %77 = arith.addf %75, %76 : vector<2x128xf32>
    %78 = arith.negf %77 : vector<2x128xf32>
    %79 = math.exp %78 : vector<2x128xf32>
    %cst_38 = arith.constant 1.000000e+00 : f32
    %80 = vector.broadcast %cst_38 : f32 to vector<2x128xf32>
    %81 = arith.addf %80, %79 : vector<2x128xf32>
    %82 = arith.divf %80, %81 : vector<2x128xf32>
    %83 = math.tanh %77 : vector<2x128xf32>
    %84 = vector.extract_strided_slice %82 {offsets = [0, 0], sizes = [2, 32], strides = [1, 1]} : vector<2x128xf32> to vector<2x32xf32>
    %85 = vector.extract_strided_slice %82 {offsets = [0, 32], sizes = [2, 32], strides = [1, 1]} : vector<2x128xf32> to vector<2x32xf32>
    %86 = vector.extract_strided_slice %83 {offsets = [0, 64], sizes = [2, 32], strides = [1, 1]} : vector<2x128xf32> to vector<2x32xf32>
    %87 = vector.extract_strided_slice %82 {offsets = [0, 96], sizes = [2, 32], strides = [1, 1]} : vector<2x128xf32> to vector<2x32xf32>
    %88 = arith.mulf %85, %51 : vector<2x32xf32>
    %89 = arith.mulf %84, %86 : vector<2x32xf32>
    %90 = arith.addf %88, %89 : vector<2x32xf32>
    %91 = math.tanh %90 : vector<2x32xf32>
    %92 = arith.mulf %87, %91 : vector<2x32xf32>
    %c2 = arith.constant 2 : index
    %c0_39 = arith.constant 0 : index
    %93 = vector.load %arg13[%c2, %c0_39] : memref<16x32xf32, #tpu.memory_space<vmem>>, vector<2x32xf32>
    tpu.vector_store %arg13[%c2, %c0_39], %92 {strides = array<i32>} : memref<16x32xf32, #tpu.memory_space<vmem>>, vector<2x32xf32>,
    %cst_40 = arith.constant dense<0.000000e+00> : vector<2x128xf32>
    %94 = tpu.matmul %71, %11, %cst_40 {dimension_numbers = #tpu.dot_dimension_numbers<[1], [0], [0], [1], [0, 0, 1, 1], [], []>} : vector<2x32xf32>, vector<32x128xf32>, vector<2x128xf32> -> vector<2x128xf32>
    %95 = arith.addf %94, %10 : vector<2x128xf32>
    %96 = arith.negf %95 : vector<2x128xf32>
    %97 = math.exp %96 : vector<2x128xf32>
    %cst_41 = arith.constant 1.000000e+00 : f32
    %98 = vector.broadcast %cst_41 : f32 to vector<2x128xf32>
    %99 = arith.addf %98, %97 : vector<2x128xf32>
    %100 = arith.divf %98, %99 : vector<2x128xf32>
    %101 = math.tanh %95 : vector<2x128xf32>
    %102 = vector.extract_strided_slice %100 {offsets = [0, 0], sizes = [2, 32], strides = [1, 1]} : vector<2x128xf32> to vector<2x32xf32>
    %103 = vector.extract_strided_slice %100 {offsets = [0, 32], sizes = [2, 32], strides = [1, 1]} : vector<2x128xf32> to vector<2x32xf32>
    %104 = vector.extract_strided_slice %101 {offsets = [0, 64], sizes = [2, 32], strides = [1, 1]} : vector<2x128xf32> to vector<2x32xf32>
    %105 = vector.extract_strided_slice %100 {offsets = [0, 96], sizes = [2, 32], strides = [1, 1]} : vector<2x128xf32> to vector<2x32xf32>
    %106 = arith.mulf %103, %69 : vector<2x32xf32>
    %107 = arith.mulf %102, %104 : vector<2x32xf32>
    %108 = arith.addf %106, %107 : vector<2x32xf32>
    %109 = math.tanh %108 : vector<2x32xf32>
    %110 = arith.mulf %105, %109 : vector<2x32xf32>
    %c0_42 = arith.constant 0 : index
    %c0_43 = arith.constant 0 : index
    %111 = vector.load %arg14[%c0_42, %c0_43] : memref<2x64xf32, #tpu.memory_space<vmem>>, vector<2x32xf32>
    tpu.vector_store %arg14[%c0_42, %c0_43], %110 {strides = array<i32>} : memref<2x64xf32, #tpu.memory_space<vmem>>, vector<2x32xf32>,
    %c0_44 = arith.constant 0 : index
    %c32_45 = arith.constant 32 : index
    %112 = vector.load %arg14[%c0_44, %c32_45] : memref<2x64xf32, #tpu.memory_space<vmem>>, vector<2x32xf32>
    tpu.vector_store %arg14[%c0_44, %c32_45], %92 {strides = array<i32>} : memref<2x64xf32, #tpu.memory_space<vmem>>, vector<2x32xf32>,
    %c0_46 = arith.constant 0 : index
    %c0_47 = arith.constant 0 : index
    %113 = vector.load %arg14[%c0_46, %c0_47] : memref<2x64xf32, #tpu.memory_space<vmem>>, vector<2x64xf32>
    %cst_48 = arith.constant dense<0.000000e+00> : vector<2x128xf32>
    %114 = tpu.matmul %113, %12, %cst_48 {dimension_numbers = #tpu.dot_dimension_numbers<[1], [0], [0], [1], [0, 0, 1, 1], [], []>} : vector<2x64xf32>, vector<64x128xf32>, vector<2x128xf32> -> vector<2x128xf32>
    %115 = vector.broadcast %13 : vector<1x128xf32> to vector<2x128xf32>
    %116 = arith.addf %114, %115 : vector<2x128xf32>
    %117 = arith.negf %116 : vector<2x128xf32>
    %118 = math.exp %117 : vector<2x128xf32>
    %cst_49 = arith.constant 1.000000e+00 : f32
    %119 = vector.broadcast %cst_49 : f32 to vector<2x128xf32>
    %120 = arith.addf %119, %118 : vector<2x128xf32>
    %121 = arith.divf %119, %120 : vector<2x128xf32>
    %122 = math.tanh %116 : vector<2x128xf32>
    %123 = vector.extract_strided_slice %121 {offsets = [0, 0], sizes = [2, 32], strides = [1, 1]} : vector<2x128xf32> to vector<2x32xf32>
    %124 = vector.extract_strided_slice %121 {offsets = [0, 32], sizes = [2, 32], strides = [1, 1]} : vector<2x128xf32> to vector<2x32xf32>
    %125 = vector.extract_strided_slice %122 {offsets = [0, 64], sizes = [2, 32], strides = [1, 1]} : vector<2x128xf32> to vector<2x32xf32>
    %126 = vector.extract_strided_slice %121 {offsets = [0, 96], sizes = [2, 32], strides = [1, 1]} : vector<2x128xf32> to vector<2x32xf32>
    %127 = arith.mulf %124, %90 : vector<2x32xf32>
    %128 = arith.mulf %123, %125 : vector<2x32xf32>
    %129 = arith.addf %127, %128 : vector<2x32xf32>
    %130 = math.tanh %129 : vector<2x32xf32>
    %131 = arith.mulf %126, %130 : vector<2x32xf32>
    %c4 = arith.constant 4 : index
    %c0_50 = arith.constant 0 : index
    %132 = vector.load %arg13[%c4, %c0_50] : memref<16x32xf32, #tpu.memory_space<vmem>>, vector<2x32xf32>
    tpu.vector_store %arg13[%c4, %c0_50], %131 {strides = array<i32>} : memref<16x32xf32, #tpu.memory_space<vmem>>, vector<2x32xf32>,
    %cst_51 = arith.constant dense<0.000000e+00> : vector<2x128xf32>
    %133 = tpu.matmul %110, %11, %cst_51 {dimension_numbers = #tpu.dot_dimension_numbers<[1], [0], [0], [1], [0, 0, 1, 1], [], []>} : vector<2x32xf32>, vector<32x128xf32>, vector<2x128xf32> -> vector<2x128xf32>
    %134 = arith.addf %133, %10 : vector<2x128xf32>
    %135 = arith.negf %134 : vector<2x128xf32>
    %136 = math.exp %135 : vector<2x128xf32>
    %cst_52 = arith.constant 1.000000e+00 : f32
    %137 = vector.broadcast %cst_52 : f32 to vector<2x128xf32>
    %138 = arith.addf %137, %136 : vector<2x128xf32>
    %139 = arith.divf %137, %138 : vector<2x128xf32>
    %140 = math.tanh %134 : vector<2x128xf32>
    %141 = vector.extract_strided_slice %139 {offsets = [0, 0], sizes = [2, 32], strides = [1, 1]} : vector<2x128xf32> to vector<2x32xf32>
    %142 = vector.extract_strided_slice %139 {offsets = [0, 32], sizes = [2, 32], strides = [1, 1]} : vector<2x128xf32> to vector<2x32xf32>
    %143 = vector.extract_strided_slice %140 {offsets = [0, 64], sizes = [2, 32], strides = [1, 1]} : vector<2x128xf32> to vector<2x32xf32>
    %144 = vector.extract_strided_slice %139 {offsets = [0, 96], sizes = [2, 32], strides = [1, 1]} : vector<2x128xf32> to vector<2x32xf32>
    %145 = arith.mulf %142, %108 : vector<2x32xf32>
    %146 = arith.mulf %141, %143 : vector<2x32xf32>
    %147 = arith.addf %145, %146 : vector<2x32xf32>
    %148 = math.tanh %147 : vector<2x32xf32>
    %149 = arith.mulf %144, %148 : vector<2x32xf32>
    %c0_53 = arith.constant 0 : index
    %c0_54 = arith.constant 0 : index
    %150 = vector.load %arg14[%c0_53, %c0_54] : memref<2x64xf32, #tpu.memory_space<vmem>>, vector<2x32xf32>
    tpu.vector_store %arg14[%c0_53, %c0_54], %149 {strides = array<i32>} : memref<2x64xf32, #tpu.memory_space<vmem>>, vector<2x32xf32>,
    %c0_55 = arith.constant 0 : index
    %c32_56 = arith.constant 32 : index
    %151 = vector.load %arg14[%c0_55, %c32_56] : memref<2x64xf32, #tpu.memory_space<vmem>>, vector<2x32xf32>
    tpu.vector_store %arg14[%c0_55, %c32_56], %131 {strides = array<i32>} : memref<2x64xf32, #tpu.memory_space<vmem>>, vector<2x32xf32>,
    %c0_57 = arith.constant 0 : index
    %c0_58 = arith.constant 0 : index
    %152 = vector.load %arg14[%c0_57, %c0_58] : memref<2x64xf32, #tpu.memory_space<vmem>>, vector<2x64xf32>
    %cst_59 = arith.constant dense<0.000000e+00> : vector<2x128xf32>
    %153 = tpu.matmul %152, %12, %cst_59 {dimension_numbers = #tpu.dot_dimension_numbers<[1], [0], [0], [1], [0, 0, 1, 1], [], []>} : vector<2x64xf32>, vector<64x128xf32>, vector<2x128xf32> -> vector<2x128xf32>
    %154 = vector.broadcast %13 : vector<1x128xf32> to vector<2x128xf32>
    %155 = arith.addf %153, %154 : vector<2x128xf32>
    %156 = arith.negf %155 : vector<2x128xf32>
    %157 = math.exp %156 : vector<2x128xf32>
    %cst_60 = arith.constant 1.000000e+00 : f32
    %158 = vector.broadcast %cst_60 : f32 to vector<2x128xf32>
    %159 = arith.addf %158, %157 : vector<2x128xf32>
    %160 = arith.divf %158, %159 : vector<2x128xf32>
    %161 = math.tanh %155 : vector<2x128xf32>
    %162 = vector.extract_strided_slice %160 {offsets = [0, 0], sizes = [2, 32], strides = [1, 1]} : vector<2x128xf32> to vector<2x32xf32>
    %163 = vector.extract_strided_slice %160 {offsets = [0, 32], sizes = [2, 32], strides = [1, 1]} : vector<2x128xf32> to vector<2x32xf32>
    %164 = vector.extract_strided_slice %161 {offsets = [0, 64], sizes = [2, 32], strides = [1, 1]} : vector<2x128xf32> to vector<2x32xf32>
    %165 = vector.extract_strided_slice %160 {offsets = [0, 96], sizes = [2, 32], strides = [1, 1]} : vector<2x128xf32> to vector<2x32xf32>
    %166 = arith.mulf %163, %129 : vector<2x32xf32>
    %167 = arith.mulf %162, %164 : vector<2x32xf32>
    %168 = arith.addf %166, %167 : vector<2x32xf32>
    %169 = math.tanh %168 : vector<2x32xf32>
    %170 = arith.mulf %165, %169 : vector<2x32xf32>
    %c6 = arith.constant 6 : index
    %c0_61 = arith.constant 0 : index
    %171 = vector.load %arg13[%c6, %c0_61] : memref<16x32xf32, #tpu.memory_space<vmem>>, vector<2x32xf32>
    tpu.vector_store %arg13[%c6, %c0_61], %170 {strides = array<i32>} : memref<16x32xf32, #tpu.memory_space<vmem>>, vector<2x32xf32>,
    %cst_62 = arith.constant dense<0.000000e+00> : vector<2x128xf32>
    %172 = tpu.matmul %149, %11, %cst_62 {dimension_numbers = #tpu.dot_dimension_numbers<[1], [0], [0], [1], [0, 0, 1, 1], [], []>} : vector<2x32xf32>, vector<32x128xf32>, vector<2x128xf32> -> vector<2x128xf32>
    %173 = arith.addf %172, %10 : vector<2x128xf32>
    %174 = arith.negf %173 : vector<2x128xf32>
    %175 = math.exp %174 : vector<2x128xf32>
    %cst_63 = arith.constant 1.000000e+00 : f32
    %176 = vector.broadcast %cst_63 : f32 to vector<2x128xf32>
    %177 = arith.addf %176, %175 : vector<2x128xf32>
    %178 = arith.divf %176, %177 : vector<2x128xf32>
    %179 = math.tanh %173 : vector<2x128xf32>
    %180 = vector.extract_strided_slice %178 {offsets = [0, 0], sizes = [2, 32], strides = [1, 1]} : vector<2x128xf32> to vector<2x32xf32>
    %181 = vector.extract_strided_slice %178 {offsets = [0, 32], sizes = [2, 32], strides = [1, 1]} : vector<2x128xf32> to vector<2x32xf32>
    %182 = vector.extract_strided_slice %179 {offsets = [0, 64], sizes = [2, 32], strides = [1, 1]} : vector<2x128xf32> to vector<2x32xf32>
    %183 = vector.extract_strided_slice %178 {offsets = [0, 96], sizes = [2, 32], strides = [1, 1]} : vector<2x128xf32> to vector<2x32xf32>
    %184 = arith.mulf %181, %147 : vector<2x32xf32>
    %185 = arith.mulf %180, %182 : vector<2x32xf32>
    %186 = arith.addf %184, %185 : vector<2x32xf32>
    %187 = math.tanh %186 : vector<2x32xf32>
    %188 = arith.mulf %183, %187 : vector<2x32xf32>
    %c0_64 = arith.constant 0 : index
    %c0_65 = arith.constant 0 : index
    %189 = vector.load %arg14[%c0_64, %c0_65] : memref<2x64xf32, #tpu.memory_space<vmem>>, vector<2x32xf32>
    tpu.vector_store %arg14[%c0_64, %c0_65], %188 {strides = array<i32>} : memref<2x64xf32, #tpu.memory_space<vmem>>, vector<2x32xf32>,
    %c0_66 = arith.constant 0 : index
    %c32_67 = arith.constant 32 : index
    %190 = vector.load %arg14[%c0_66, %c32_67] : memref<2x64xf32, #tpu.memory_space<vmem>>, vector<2x32xf32>
    tpu.vector_store %arg14[%c0_66, %c32_67], %170 {strides = array<i32>} : memref<2x64xf32, #tpu.memory_space<vmem>>, vector<2x32xf32>,
    %c0_68 = arith.constant 0 : index
    %c0_69 = arith.constant 0 : index
    %191 = vector.load %arg14[%c0_68, %c0_69] : memref<2x64xf32, #tpu.memory_space<vmem>>, vector<2x64xf32>
    %cst_70 = arith.constant dense<0.000000e+00> : vector<2x128xf32>
    %192 = tpu.matmul %191, %12, %cst_70 {dimension_numbers = #tpu.dot_dimension_numbers<[1], [0], [0], [1], [0, 0, 1, 1], [], []>} : vector<2x64xf32>, vector<64x128xf32>, vector<2x128xf32> -> vector<2x128xf32>
    %193 = vector.broadcast %13 : vector<1x128xf32> to vector<2x128xf32>
    %194 = arith.addf %192, %193 : vector<2x128xf32>
    %195 = arith.negf %194 : vector<2x128xf32>
    %196 = math.exp %195 : vector<2x128xf32>
    %cst_71 = arith.constant 1.000000e+00 : f32
    %197 = vector.broadcast %cst_71 : f32 to vector<2x128xf32>
    %198 = arith.addf %197, %196 : vector<2x128xf32>
    %199 = arith.divf %197, %198 : vector<2x128xf32>
    %200 = math.tanh %194 : vector<2x128xf32>
    %201 = vector.extract_strided_slice %199 {offsets = [0, 0], sizes = [2, 32], strides = [1, 1]} : vector<2x128xf32> to vector<2x32xf32>
    %202 = vector.extract_strided_slice %199 {offsets = [0, 32], sizes = [2, 32], strides = [1, 1]} : vector<2x128xf32> to vector<2x32xf32>
    %203 = vector.extract_strided_slice %200 {offsets = [0, 64], sizes = [2, 32], strides = [1, 1]} : vector<2x128xf32> to vector<2x32xf32>
    %204 = vector.extract_strided_slice %199 {offsets = [0, 96], sizes = [2, 32], strides = [1, 1]} : vector<2x128xf32> to vector<2x32xf32>
    %205 = arith.mulf %202, %168 : vector<2x32xf32>
    %206 = arith.mulf %201, %203 : vector<2x32xf32>
    %207 = arith.addf %205, %206 : vector<2x32xf32>
    %208 = math.tanh %207 : vector<2x32xf32>
    %209 = arith.mulf %204, %208 : vector<2x32xf32>
    %c8 = arith.constant 8 : index
    %c0_72 = arith.constant 0 : index
    %210 = vector.load %arg13[%c8, %c0_72] : memref<16x32xf32, #tpu.memory_space<vmem>>, vector<2x32xf32>
    tpu.vector_store %arg13[%c8, %c0_72], %209 {strides = array<i32>} : memref<16x32xf32, #tpu.memory_space<vmem>>, vector<2x32xf32>,
    %cst_73 = arith.constant dense<0.000000e+00> : vector<2x128xf32>
    %211 = tpu.matmul %188, %11, %cst_73 {dimension_numbers = #tpu.dot_dimension_numbers<[1], [0], [0], [1], [0, 0, 1, 1], [], []>} : vector<2x32xf32>, vector<32x128xf32>, vector<2x128xf32> -> vector<2x128xf32>
    %212 = arith.addf %211, %10 : vector<2x128xf32>
    %213 = arith.negf %212 : vector<2x128xf32>
    %214 = math.exp %213 : vector<2x128xf32>
    %cst_74 = arith.constant 1.000000e+00 : f32
    %215 = vector.broadcast %cst_74 : f32 to vector<2x128xf32>
    %216 = arith.addf %215, %214 : vector<2x128xf32>
    %217 = arith.divf %215, %216 : vector<2x128xf32>
    %218 = math.tanh %212 : vector<2x128xf32>
    %219 = vector.extract_strided_slice %217 {offsets = [0, 0], sizes = [2, 32], strides = [1, 1]} : vector<2x128xf32> to vector<2x32xf32>
    %220 = vector.extract_strided_slice %217 {offsets = [0, 32], sizes = [2, 32], strides = [1, 1]} : vector<2x128xf32> to vector<2x32xf32>
    %221 = vector.extract_strided_slice %218 {offsets = [0, 64], sizes = [2, 32], strides = [1, 1]} : vector<2x128xf32> to vector<2x32xf32>
    %222 = vector.extract_strided_slice %217 {offsets = [0, 96], sizes = [2, 32], strides = [1, 1]} : vector<2x128xf32> to vector<2x32xf32>
    %223 = arith.mulf %220, %186 : vector<2x32xf32>
    %224 = arith.mulf %219, %221 : vector<2x32xf32>
    %225 = arith.addf %223, %224 : vector<2x32xf32>
    %226 = math.tanh %225 : vector<2x32xf32>
    %227 = arith.mulf %222, %226 : vector<2x32xf32>
    %c0_75 = arith.constant 0 : index
    %c0_76 = arith.constant 0 : index
    %228 = vector.load %arg14[%c0_75, %c0_76] : memref<2x64xf32, #tpu.memory_space<vmem>>, vector<2x32xf32>
    tpu.vector_store %arg14[%c0_75, %c0_76], %227 {strides = array<i32>} : memref<2x64xf32, #tpu.memory_space<vmem>>, vector<2x32xf32>,
    %c0_77 = arith.constant 0 : index
    %c32_78 = arith.constant 32 : index
    %229 = vector.load %arg14[%c0_77, %c32_78] : memref<2x64xf32, #tpu.memory_space<vmem>>, vector<2x32xf32>
    tpu.vector_store %arg14[%c0_77, %c32_78], %209 {strides = array<i32>} : memref<2x64xf32, #tpu.memory_space<vmem>>, vector<2x32xf32>,
    %c0_79 = arith.constant 0 : index
    %c0_80 = arith.constant 0 : index
    %230 = vector.load %arg14[%c0_79, %c0_80] : memref<2x64xf32, #tpu.memory_space<vmem>>, vector<2x64xf32>
    %cst_81 = arith.constant dense<0.000000e+00> : vector<2x128xf32>
    %231 = tpu.matmul %230, %12, %cst_81 {dimension_numbers = #tpu.dot_dimension_numbers<[1], [0], [0], [1], [0, 0, 1, 1], [], []>} : vector<2x64xf32>, vector<64x128xf32>, vector<2x128xf32> -> vector<2x128xf32>
    %232 = vector.broadcast %13 : vector<1x128xf32> to vector<2x128xf32>
    %233 = arith.addf %231, %232 : vector<2x128xf32>
    %234 = arith.negf %233 : vector<2x128xf32>
    %235 = math.exp %234 : vector<2x128xf32>
    %cst_82 = arith.constant 1.000000e+00 : f32
    %236 = vector.broadcast %cst_82 : f32 to vector<2x128xf32>
    %237 = arith.addf %236, %235 : vector<2x128xf32>
    %238 = arith.divf %236, %237 : vector<2x128xf32>
    %239 = math.tanh %233 : vector<2x128xf32>
    %240 = vector.extract_strided_slice %238 {offsets = [0, 0], sizes = [2, 32], strides = [1, 1]} : vector<2x128xf32> to vector<2x32xf32>
    %241 = vector.extract_strided_slice %238 {offsets = [0, 32], sizes = [2, 32], strides = [1, 1]} : vector<2x128xf32> to vector<2x32xf32>
    %242 = vector.extract_strided_slice %239 {offsets = [0, 64], sizes = [2, 32], strides = [1, 1]} : vector<2x128xf32> to vector<2x32xf32>
    %243 = vector.extract_strided_slice %238 {offsets = [0, 96], sizes = [2, 32], strides = [1, 1]} : vector<2x128xf32> to vector<2x32xf32>
    %244 = arith.mulf %241, %207 : vector<2x32xf32>
    %245 = arith.mulf %240, %242 : vector<2x32xf32>
    %246 = arith.addf %244, %245 : vector<2x32xf32>
    %247 = math.tanh %246 : vector<2x32xf32>
    %248 = arith.mulf %243, %247 : vector<2x32xf32>
    %c10 = arith.constant 10 : index
    %c0_83 = arith.constant 0 : index
    %249 = vector.load %arg13[%c10, %c0_83] : memref<16x32xf32, #tpu.memory_space<vmem>>, vector<2x32xf32>
    tpu.vector_store %arg13[%c10, %c0_83], %248 {strides = array<i32>} : memref<16x32xf32, #tpu.memory_space<vmem>>, vector<2x32xf32>,
    %cst_84 = arith.constant dense<0.000000e+00> : vector<2x128xf32>
    %250 = tpu.matmul %227, %11, %cst_84 {dimension_numbers = #tpu.dot_dimension_numbers<[1], [0], [0], [1], [0, 0, 1, 1], [], []>} : vector<2x32xf32>, vector<32x128xf32>, vector<2x128xf32> -> vector<2x128xf32>
    %251 = arith.addf %250, %10 : vector<2x128xf32>
    %252 = arith.negf %251 : vector<2x128xf32>
    %253 = math.exp %252 : vector<2x128xf32>
    %cst_85 = arith.constant 1.000000e+00 : f32
    %254 = vector.broadcast %cst_85 : f32 to vector<2x128xf32>
    %255 = arith.addf %254, %253 : vector<2x128xf32>
    %256 = arith.divf %254, %255 : vector<2x128xf32>
    %257 = math.tanh %251 : vector<2x128xf32>
    %258 = vector.extract_strided_slice %256 {offsets = [0, 0], sizes = [2, 32], strides = [1, 1]} : vector<2x128xf32> to vector<2x32xf32>
    %259 = vector.extract_strided_slice %256 {offsets = [0, 32], sizes = [2, 32], strides = [1, 1]} : vector<2x128xf32> to vector<2x32xf32>
    %260 = vector.extract_strided_slice %257 {offsets = [0, 64], sizes = [2, 32], strides = [1, 1]} : vector<2x128xf32> to vector<2x32xf32>
    %261 = vector.extract_strided_slice %256 {offsets = [0, 96], sizes = [2, 32], strides = [1, 1]} : vector<2x128xf32> to vector<2x32xf32>
    %262 = arith.mulf %259, %225 : vector<2x32xf32>
    %263 = arith.mulf %258, %260 : vector<2x32xf32>
    %264 = arith.addf %262, %263 : vector<2x32xf32>
    %265 = math.tanh %264 : vector<2x32xf32>
    %266 = arith.mulf %261, %265 : vector<2x32xf32>
    %c0_86 = arith.constant 0 : index
    %c0_87 = arith.constant 0 : index
    %267 = vector.load %arg14[%c0_86, %c0_87] : memref<2x64xf32, #tpu.memory_space<vmem>>, vector<2x32xf32>
    tpu.vector_store %arg14[%c0_86, %c0_87], %266 {strides = array<i32>} : memref<2x64xf32, #tpu.memory_space<vmem>>, vector<2x32xf32>,
    %c0_88 = arith.constant 0 : index
    %c32_89 = arith.constant 32 : index
    %268 = vector.load %arg14[%c0_88, %c32_89] : memref<2x64xf32, #tpu.memory_space<vmem>>, vector<2x32xf32>
    tpu.vector_store %arg14[%c0_88, %c32_89], %248 {strides = array<i32>} : memref<2x64xf32, #tpu.memory_space<vmem>>, vector<2x32xf32>,
    %c0_90 = arith.constant 0 : index
    %c0_91 = arith.constant 0 : index
    %269 = vector.load %arg14[%c0_90, %c0_91] : memref<2x64xf32, #tpu.memory_space<vmem>>, vector<2x64xf32>
    %cst_92 = arith.constant dense<0.000000e+00> : vector<2x128xf32>
    %270 = tpu.matmul %269, %12, %cst_92 {dimension_numbers = #tpu.dot_dimension_numbers<[1], [0], [0], [1], [0, 0, 1, 1], [], []>} : vector<2x64xf32>, vector<64x128xf32>, vector<2x128xf32> -> vector<2x128xf32>
    %271 = vector.broadcast %13 : vector<1x128xf32> to vector<2x128xf32>
    %272 = arith.addf %270, %271 : vector<2x128xf32>
    %273 = arith.negf %272 : vector<2x128xf32>
    %274 = math.exp %273 : vector<2x128xf32>
    %cst_93 = arith.constant 1.000000e+00 : f32
    %275 = vector.broadcast %cst_93 : f32 to vector<2x128xf32>
    %276 = arith.addf %275, %274 : vector<2x128xf32>
    %277 = arith.divf %275, %276 : vector<2x128xf32>
    %278 = math.tanh %272 : vector<2x128xf32>
    %279 = vector.extract_strided_slice %277 {offsets = [0, 0], sizes = [2, 32], strides = [1, 1]} : vector<2x128xf32> to vector<2x32xf32>
    %280 = vector.extract_strided_slice %277 {offsets = [0, 32], sizes = [2, 32], strides = [1, 1]} : vector<2x128xf32> to vector<2x32xf32>
    %281 = vector.extract_strided_slice %278 {offsets = [0, 64], sizes = [2, 32], strides = [1, 1]} : vector<2x128xf32> to vector<2x32xf32>
    %282 = vector.extract_strided_slice %277 {offsets = [0, 96], sizes = [2, 32], strides = [1, 1]} : vector<2x128xf32> to vector<2x32xf32>
    %283 = arith.mulf %280, %246 : vector<2x32xf32>
    %284 = arith.mulf %279, %281 : vector<2x32xf32>
    %285 = arith.addf %283, %284 : vector<2x32xf32>
    %286 = math.tanh %285 : vector<2x32xf32>
    %287 = arith.mulf %282, %286 : vector<2x32xf32>
    %c12 = arith.constant 12 : index
    %c0_94 = arith.constant 0 : index
    %288 = vector.load %arg13[%c12, %c0_94] : memref<16x32xf32, #tpu.memory_space<vmem>>, vector<2x32xf32>
    tpu.vector_store %arg13[%c12, %c0_94], %287 {strides = array<i32>} : memref<16x32xf32, #tpu.memory_space<vmem>>, vector<2x32xf32>,
    %cst_95 = arith.constant dense<0.000000e+00> : vector<2x128xf32>
    %289 = tpu.matmul %266, %11, %cst_95 {dimension_numbers = #tpu.dot_dimension_numbers<[1], [0], [0], [1], [0, 0, 1, 1], [], []>} : vector<2x32xf32>, vector<32x128xf32>, vector<2x128xf32> -> vector<2x128xf32>
    %290 = arith.addf %289, %10 : vector<2x128xf32>
    %291 = arith.negf %290 : vector<2x128xf32>
    %292 = math.exp %291 : vector<2x128xf32>
    %cst_96 = arith.constant 1.000000e+00 : f32
    %293 = vector.broadcast %cst_96 : f32 to vector<2x128xf32>
    %294 = arith.addf %293, %292 : vector<2x128xf32>
    %295 = arith.divf %293, %294 : vector<2x128xf32>
    %296 = math.tanh %290 : vector<2x128xf32>
    %297 = vector.extract_strided_slice %295 {offsets = [0, 0], sizes = [2, 32], strides = [1, 1]} : vector<2x128xf32> to vector<2x32xf32>
    %298 = vector.extract_strided_slice %295 {offsets = [0, 32], sizes = [2, 32], strides = [1, 1]} : vector<2x128xf32> to vector<2x32xf32>
    %299 = vector.extract_strided_slice %296 {offsets = [0, 64], sizes = [2, 32], strides = [1, 1]} : vector<2x128xf32> to vector<2x32xf32>
    %300 = vector.extract_strided_slice %295 {offsets = [0, 96], sizes = [2, 32], strides = [1, 1]} : vector<2x128xf32> to vector<2x32xf32>
    %301 = arith.mulf %298, %264 : vector<2x32xf32>
    %302 = arith.mulf %297, %299 : vector<2x32xf32>
    %303 = arith.addf %301, %302 : vector<2x32xf32>
    %304 = math.tanh %303 : vector<2x32xf32>
    %305 = arith.mulf %300, %304 : vector<2x32xf32>
    %c0_97 = arith.constant 0 : index
    %c0_98 = arith.constant 0 : index
    %306 = vector.load %arg14[%c0_97, %c0_98] : memref<2x64xf32, #tpu.memory_space<vmem>>, vector<2x32xf32>
    tpu.vector_store %arg14[%c0_97, %c0_98], %305 {strides = array<i32>} : memref<2x64xf32, #tpu.memory_space<vmem>>, vector<2x32xf32>,
    %c0_99 = arith.constant 0 : index
    %c32_100 = arith.constant 32 : index
    %307 = vector.load %arg14[%c0_99, %c32_100] : memref<2x64xf32, #tpu.memory_space<vmem>>, vector<2x32xf32>
    tpu.vector_store %arg14[%c0_99, %c32_100], %287 {strides = array<i32>} : memref<2x64xf32, #tpu.memory_space<vmem>>, vector<2x32xf32>,
    %c0_101 = arith.constant 0 : index
    %c0_102 = arith.constant 0 : index
    %308 = vector.load %arg14[%c0_101, %c0_102] : memref<2x64xf32, #tpu.memory_space<vmem>>, vector<2x64xf32>
    %cst_103 = arith.constant dense<0.000000e+00> : vector<2x128xf32>
    %309 = tpu.matmul %308, %12, %cst_103 {dimension_numbers = #tpu.dot_dimension_numbers<[1], [0], [0], [1], [0, 0, 1, 1], [], []>} : vector<2x64xf32>, vector<64x128xf32>, vector<2x128xf32> -> vector<2x128xf32>
    %310 = vector.broadcast %13 : vector<1x128xf32> to vector<2x128xf32>
    %311 = arith.addf %309, %310 : vector<2x128xf32>
    %312 = arith.negf %311 : vector<2x128xf32>
    %313 = math.exp %312 : vector<2x128xf32>
    %cst_104 = arith.constant 1.000000e+00 : f32
    %314 = vector.broadcast %cst_104 : f32 to vector<2x128xf32>
    %315 = arith.addf %314, %313 : vector<2x128xf32>
    %316 = arith.divf %314, %315 : vector<2x128xf32>
    %317 = math.tanh %311 : vector<2x128xf32>
    %318 = vector.extract_strided_slice %316 {offsets = [0, 0], sizes = [2, 32], strides = [1, 1]} : vector<2x128xf32> to vector<2x32xf32>
    %319 = vector.extract_strided_slice %316 {offsets = [0, 32], sizes = [2, 32], strides = [1, 1]} : vector<2x128xf32> to vector<2x32xf32>
    %320 = vector.extract_strided_slice %317 {offsets = [0, 64], sizes = [2, 32], strides = [1, 1]} : vector<2x128xf32> to vector<2x32xf32>
    %321 = vector.extract_strided_slice %316 {offsets = [0, 96], sizes = [2, 32], strides = [1, 1]} : vector<2x128xf32> to vector<2x32xf32>
    %322 = arith.mulf %319, %285 : vector<2x32xf32>
    %323 = arith.mulf %318, %320 : vector<2x32xf32>
    %324 = arith.addf %322, %323 : vector<2x32xf32>
    %325 = math.tanh %324 : vector<2x32xf32>
    %326 = arith.mulf %321, %325 : vector<2x32xf32>
    %c14 = arith.constant 14 : index
    %c0_105 = arith.constant 0 : index
    %327 = vector.load %arg13[%c14, %c0_105] : memref<16x32xf32, #tpu.memory_space<vmem>>, vector<2x32xf32>
    tpu.vector_store %arg13[%c14, %c0_105], %326 {strides = array<i32>} : memref<16x32xf32, #tpu.memory_space<vmem>>, vector<2x32xf32>,
    %c0_106 = arith.constant 0 : index
    %c0_107 = arith.constant 0 : index
    %328 = vector.load %arg13[%c0_106, %c0_107] : memref<16x32xf32, #tpu.memory_space<vmem>>, vector<16x32xf32>
    %c0_108 = arith.constant 0 : index
    %c0_109 = arith.constant 0 : index
    %329 = vector.load %arg8[%c0_108, %c0_109] : memref<32x32xf32, #tpu.memory_space<vmem>>, vector<32x32xf32>
    %cst_110 = arith.constant dense<0.000000e+00> : vector<16x32xf32>
    %330 = tpu.matmul %328, %329, %cst_110 {dimension_numbers = #tpu.dot_dimension_numbers<[1], [0], [0], [1], [0, 0, 1, 1], [], []>} : vector<16x32xf32>, vector<32x32xf32>, vector<16x32xf32> -> vector<16x32xf32>
    %c0_111 = arith.constant 0 : index
    %c0_112 = arith.constant 0 : index
    %331 = vector.load %arg9[%c0_111, %c0_112] : memref<1x32xf32, #tpu.memory_space<vmem>>, vector<1x32xf32>
    %332 = vector.broadcast %331 : vector<1x32xf32> to vector<16x32xf32>
    %333 = arith.addf %330, %332 : vector<16x32xf32>
    %cst_113 = arith.constant 0.000000e+00 : f32
    %334 = vector.broadcast %cst_113 : f32 to vector<16x32xf32>
    %335 = arith.maximumf %333, %334 : vector<16x32xf32>
    %c0_114 = arith.constant 0 : index
    %c0_115 = arith.constant 0 : index
    %336 = vector.load %arg10[%c0_114, %c0_115] : memref<32x16xf32, #tpu.memory_space<vmem>>, vector<32x16xf32>
    %cst_116 = arith.constant dense<0.000000e+00> : vector<16x16xf32>
    %337 = tpu.matmul %335, %336, %cst_116 {dimension_numbers = #tpu.dot_dimension_numbers<[1], [0], [0], [1], [0, 0, 1, 1], [], []>} : vector<16x32xf32>, vector<32x16xf32>, vector<16x16xf32> -> vector<16x16xf32>
    %c0_117 = arith.constant 0 : index
    %c0_118 = arith.constant 0 : index
    %338 = vector.load %arg11[%c0_117, %c0_118] : memref<1x16xf32, #tpu.memory_space<vmem>>, vector<1x16xf32>
    %339 = vector.broadcast %338 : vector<1x16xf32> to vector<16x16xf32>
    %340 = arith.addf %337, %339 : vector<16x16xf32>
    %c0_119 = arith.constant 0 : index
    %c0_120 = arith.constant 0 : index
    %341 = vector.load %arg12[%c0_119, %c0_120] : memref<16x16xf32, #tpu.memory_space<vmem>>, vector<16x16xf32>
    tpu.vector_store %arg12[%c0_119, %c0_120], %340 {strides = array<i32>} : memref<16x16xf32, #tpu.memory_space<vmem>>, vector<16x16xf32>,
    return
  }
}

</mosaic_0001>

<llo_original>
// kernel: tpu_custom_call.1
$region0: #{tpu_custom_call.1}
  #allocation0 [shape = 'u32[]', space=smem, size = 0x4, offset = 0x4, fixed_abs, tag = 'smem constant byte address 0x4 - core index']
  #allocation1 [shape = 'u32[72,128]{1,0:T(1,128)}', space=vmem, size = 0x9000, scoped, tag = 'internal scratch']
  #allocation2 [shape = 'f32[16,32]{1,0:T(8,128)}', space=vmem, size = 0x2000, scoped, tag = 'scratch operand']
  #allocation3 [shape = 'f32[2,64]{1,0:T(2,128)}', space=vmem, size = 0x400, scoped, tag = 'scratch operand']
  %s0 = inlined_call_operand.vmem [shape: f32[2,8], index: 0, kind: input, shape index: {}]
  %s1 = inlined_call_operand.vmem [shape: f32[8,32], index: 1, kind: input, shape index: {}]
  %s2 = inlined_call_operand.vmem [shape: f32[1,32], index: 2, kind: input, shape index: {}]
  %s3 = inlined_call_operand.vmem [shape: f32[32,128], index: 3, kind: input, shape index: {}]
  %s4 = inlined_call_operand.hbm [shape: f32[32,128], index: 4, kind: input, shape index: {}]
  %s5 = inlined_call_operand.vmem [shape: f32[1,128], index: 5, kind: input, shape index: {}]
  %s6 = inlined_call_operand.hbm [shape: f32[64,128], index: 6, kind: input, shape index: {}]
  %s7 = inlined_call_operand.vmem [shape: f32[1,128], index: 7, kind: input, shape index: {}]
  %s8 = inlined_call_operand.hbm [shape: f32[32,32], index: 8, kind: input, shape index: {}]
  %s9 = inlined_call_operand.vmem [shape: f32[1,32], index: 9, kind: input, shape index: {}]
  %s10 = inlined_call_operand.vmem [shape: f32[32,16], index: 10, kind: input, shape index: {}]
  %s11 = inlined_call_operand.vmem [shape: f32[1,16], index: 11, kind: input, shape index: {}]
  %s12 = inlined_call_operand.hbm [shape: f32[16,16], index: 12, kind: output, shape index: {}]
  %s13 = sld [smem:[#allocation0]]
  $region70: #{tpu_custom_call.1} parent=0
    _
  %s15 = ssub.s32 1, %s13
  %s16 = scalar_select 0, %s15, %s13
  $region1: #{tpu_custom_call.1} parent=0
    #allocation4 [shape = 'u8[16384]{0}', space=vmem, size = 0x4000, scoped, tag = 'input window, operand 4, single buffered']
    #allocation5 [shape = 's32[1]{0}', space=sflag, size = 0x4, scoped, tag = 'scoped memory for tpu_custom_call.1']
    #allocation6 [shape = 's32[1]{0}', space=sflag, size = 0x4, scoped, tag = 'scoped memory for tpu_custom_call.1']
    #allocation7 [shape = 'u8[32768]{0}', space=vmem, size = 0x8000, scoped, tag = 'input window, operand 6, single buffered']
    #allocation8 [shape = 's32[1]{0}', space=sflag, size = 0x4, scoped, tag = 'scoped memory for tpu_custom_call.1']
    #allocation9 [shape = 'u8[16384]{0}', space=vmem, size = 0x4000, scoped, tag = 'input window, operand 8, single buffered']
    #allocation10 [shape = 'u8[8192]{0}', space=vmem, size = 0x2000, scoped, tag = 'output window, operand 0, single buffered']
    %17 = vsyncpa [#allocation5], 0
    %18 = vsyncpa [#allocation8], 0
    %19 = vsyncpa [#allocation6], 0
    // Predicated region
    $region2: #{tpu_custom_call.1} parent=1 // pred_check
      _
    $region3: #{tpu_custom_call.1} parent=1 // pred_check_branch
      %21 = sbr.rel (0) target = $region5
    $region4: #{tpu_custom_call.1} parent=1 // pred_region
      _
    $region5: #{tpu_custom_call.1} parent=1 // pred_fallthru
      _
    // Predicated region
    $region6: #{tpu_custom_call.1} parent=1 // pred_check
      _
    $region7: #{tpu_custom_call.1} parent=1 // pred_check_branch
      %23 = sbr.rel (0) target = $region9
    $region8: #{tpu_custom_call.1} parent=1 // pred_region
      _
    $region9: #{tpu_custom_call.1} parent=1 // pred_fallthru
      _
    // Predicated region
    $region10: #{tpu_custom_call.1} parent=1 // pred_check
      _
    $region11: #{tpu_custom_call.1} parent=1 // pred_check_branch
      %25 = sbr.rel (0) target = $region13
    $region12: #{tpu_custom_call.1} parent=1 // pred_region
      _
    $region13: #{tpu_custom_call.1} parent=1 // pred_fallthru
      _
    // Predicated region
    $region14: #{tpu_custom_call.1} parent=1 // pred_check
      _
    $region15: #{tpu_custom_call.1} parent=1 // pred_check_branch
      %27 = sbr.rel (0) target = $region17
    $region16: #{tpu_custom_call.1} parent=1 // pred_region
      _
    $region17: #{tpu_custom_call.1} parent=1 // pred_fallthru
      _
    // Predicated region
    $region18: #{tpu_custom_call.1} parent=1 // pred_check
      _
    $region19: #{tpu_custom_call.1} parent=1 // pred_check_branch
      %29 = sbr.rel (0) target = $region21
    $region20: #{tpu_custom_call.1} parent=1 // pred_region
      %31 = vsyncadd [#allocation5], 0
      %s32 = sshll.u32 %s4, 4
      %s33 = int_to_ptr.hbm [resolvable:$true] %s32
      %s34 = sshll.u32 [#allocation4], 4
      %s35 = int_to_ptr.vmem [resolvable:$true] %s34
      %40 = dma.hbm_to_vmem [thread:$0]  %s33, 512, %s35, [#allocation5], 128, 128, 8
    $region21: #{tpu_custom_call.1} parent=1 // pred_fallthru
      _
    // Predicated region
    $region22: #{tpu_custom_call.1} parent=1 // pred_check
      _
    $region23: #{tpu_custom_call.1} parent=1 // pred_check_branch
      %42 = sbr.rel (0) target = $region25
    $region24: #{tpu_custom_call.1} parent=1 // pred_region
      _
    $region25: #{tpu_custom_call.1} parent=1 // pred_fallthru
      _
    // Predicated region
    $region26: #{tpu_custom_call.1} parent=1 // pred_check
      _
    $region27: #{tpu_custom_call.1} parent=1 // pred_check_branch
      %44 = sbr.rel (0) target = $region29
    $region28: #{tpu_custom_call.1} parent=1 // pred_region
      %46 = vsyncadd [#allocation8], 0
      %s47 = sshll.u32 %s6, 4
      %s48 = int_to_ptr.hbm [resolvable:$true] %s47
      %s49 = sshll.u32 [#allocation7], 4
      %s50 = int_to_ptr.vmem [resolvable:$true] %s49
      %55 = dma.hbm_to_vmem [thread:$0]  %s48, 1024, %s50, [#allocation8], 128, 128, 8
    $region29: #{tpu_custom_call.1} parent=1 // pred_fallthru
      _
    // Predicated region
    $region30: #{tpu_custom_call.1} parent=1 // pred_check
      _
    $region31: #{tpu_custom_call.1} parent=1 // pred_check_branch
      %57 = sbr.rel (0) target = $region33
    $region32: #{tpu_custom_call.1} parent=1 // pred_region
      _
    $region33: #{tpu_custom_call.1} parent=1 // pred_fallthru
      _
    // Predicated region
    $region34: #{tpu_custom_call.1} parent=1 // pred_check
      _
    $region35: #{tpu_custom_call.1} parent=1 // pred_check_branch
      %59 = sbr.rel (0) target = $region37
    $region36: #{tpu_custom_call.1} parent=1 // pred_region
      %61 = vsyncadd [#allocation8], 0
      %s62 = sshll.u32 %s8, 4
      %s63 = int_to_ptr.hbm [resolvable:$true] %s62
      %s64 = sshll.u32 [#allocation9], 4
      %s65 = int_to_ptr.vmem [resolvable:$true] %s64
      %70 = dma.hbm_to_vmem [thread:$0]  %s63, 512, %s65, [#allocation8], 128, 128, 8
    $region37: #{tpu_custom_call.1} parent=1 // pred_fallthru
      _
    // Predicated region
    $region38: #{tpu_custom_call.1} parent=1 // pred_check
      _
    $region39: #{tpu_custom_call.1} parent=1 // pred_check_branch
      %72 = sbr.rel (0) target = $region41
    $region40: #{tpu_custom_call.1} parent=1 // pred_region
      _
    $region41: #{tpu_custom_call.1} parent=1 // pred_fallthru
      _
    // Predicated region
    $region42: #{tpu_custom_call.1} parent=1 // pred_check
      _
    $region43: #{tpu_custom_call.1} parent=1 // pred_check_branch
      %74 = sbr.rel (0) target = $region45
    $region44: #{tpu_custom_call.1} parent=1 // pred_region
      _
    $region45: #{tpu_custom_call.1} parent=1 // pred_fallthru
      _
    // Predicated region
    $region46: #{tpu_custom_call.1} parent=1 // pred_check
      _
    $region47: #{tpu_custom_call.1} parent=1 // pred_check_branch
      %76 = sbr.rel (0) target = $region49
    $region48: #{tpu_custom_call.1} parent=1 // pred_region
      _
    $region49: #{tpu_custom_call.1} parent=1 // pred_fallthru
      _
    // Predicated region
    $region50: #{tpu_custom_call.1} parent=1 // pred_check
      _
    $region51: #{tpu_custom_call.1} parent=1 // pred_check_branch
      %78 = sbr.rel (0) target = $region53
    $region52: #{tpu_custom_call.1} parent=1 // pred_region
      %80 = dma.done [#allocation5], 512
    $region53: #{tpu_custom_call.1} parent=1 // pred_fallthru
      _
    // Predicated region
    $region54: #{tpu_custom_call.1} parent=1 // pred_check
      _
    $region55: #{tpu_custom_call.1} parent=1 // pred_check_branch
      %82 = sbr.rel (0) target = $region57
    $region56: #{tpu_custom_call.1} parent=1 // pred_region
      %84 = dma.done [#allocation8], 1024
    $region57: #{tpu_custom_call.1} parent=1 // pred_fallthru
      _
    // Predicated region
    $region58: #{tpu_custom_call.1} parent=1 // pred_check
      _
    $region59: #{tpu_custom_call.1} parent=1 // pred_check_branch
      %86 = sbr.rel (0) target = $region61
    $region60: #{tpu_custom_call.1} parent=1 // pred_region
      %88 = dma.done [#allocation8], 512
    $region61: #{tpu_custom_call.1} parent=1 // pred_fallthru
      _
    %v89 = vld [vmem:[%s0] sm:$0x3]
    %v90 = vld [vmem:[%s1] sm:$0xff]
    %v91 = vld [vmem:[%s2] sm:$0x1]
    %v93 = vperm.slane %v91, 0
    %vm95 = vcmask 64512
    %v97 = vsel %vm95, %v89, 0
    %99 = vmatpush.msra.mxu0 0.0
    %100 = vmatpush.msra.mxu0 0.0
    %101 = vmatpush.msra.mxu0 0.0
    %102 = vmatpush.msra.mxu0 0.0
    %103 = vmatpush.msra.mxu0 0.0
    %104 = vmatpush.msra.mxu0 0.0
    %105 = vmatpush.msra.mxu0 0.0
    %106 = vmatpush.msra.mxu0 0.0
    %107 = vmatpush.msra.mxu0 0.0
    %108 = vmatpush.msra.mxu0 0.0
    %109 = vmatpush.msra.mxu0 0.0
    %110 = vmatpush.msra.mxu0 0.0
    %111 = vmatpush.msra.mxu0 0.0
    %112 = vmatpush.msra.mxu0 0.0
    %113 = vmatpush.msra.mxu0 0.0
    %114 = vmatpush.msra.mxu0 %v90
    %115 = vmatmul.f32.gmra.mxu0 %v97
    %v116 = vpop.f32.mrf.mxu0
    %v117 = vadd.f32 %v93, %v116
    %118 = vdwg.mxu0
    %v119 = vld [vmem:[%s3] sm:$0xff]
    %v120 = vld [vmem:[%s3 + $0x8] sm:$0xff]
    %v121 = vld [vmem:[%s3 + $0x10] sm:$0xff]
    %v122 = vld [vmem:[%s3 + $0x18] sm:$0xff]
    %v123 = vld [vmem:[%s5] sm:$0x1]
    %v125 = vperm.slane %v123, 0
    %vm127 = vcmask 261120
    %v129 = vsel %vm127, %v117, 0
    %131 = vmatpush.msra.mxu0 0.0
    %132 = vmatpush.msra.mxu0 0.0
    %133 = vmatpush.msra.mxu0 0.0
    %134 = vmatpush.msra.mxu0 0.0
    %135 = vmatpush.msra.mxu0 0.0
    %136 = vmatpush.msra.mxu0 0.0
    %137 = vmatpush.msra.mxu0 0.0
    %138 = vmatpush.msra.mxu0 0.0
    %139 = vmatpush.msra.mxu0 0.0
    %140 = vmatpush.msra.mxu0 0.0
    %141 = vmatpush.msra.mxu0 0.0
    %142 = vmatpush.msra.mxu0 0.0
    %143 = vmatpush.msra.mxu0 %v122
    %144 = vmatpush.msra.mxu0 %v121
    %145 = vmatpush.msra.mxu0 %v120
    %146 = vmatpush.msra.mxu0 %v119
    %147 = vmatmul.f32.gmra.mxu0 %v129
    %v148 = vpop.f32.mrf.mxu0
    %v149 = vadd.f32 %v125, %v148
    %150 = vdwg.mxu0
    %v151 = vld [vmem:[#allocation4] sm:$0xff]
    %v152 = vld [vmem:[#allocation4 + $0x8] sm:$0xff]
    %v153 = vld [vmem:[#allocation4 + $0x10] sm:$0xff]
    %v154 = vld [vmem:[#allocation4 + $0x18] sm:$0xff]
    %v155 = vld [vmem:[#allocation7] sm:$0xff]
    %v156 = vld [vmem:[#allocation7 + $0x8] sm:$0xff]
    %v157 = vld [vmem:[#allocation7 + $0x10] sm:$0xff]
    %v158 = vld [vmem:[#allocation7 + $0x18] sm:$0xff]
    %v159 = vld [vmem:[#allocation7 + $0x20] sm:$0xff]
    %v160 = vld [vmem:[#allocation7 + $0x28] sm:$0xff]
    %v161 = vld [vmem:[#allocation7 + $0x30] sm:$0xff]
    %v162 = vld [vmem:[#allocation7 + $0x38] sm:$0xff]
    %v163 = vld [vmem:[%s7] sm:$0x1]
    %164 = vmatpush.msra.mxu0 0.0
    %165 = vmatpush.msra.mxu0 0.0
    %166 = vmatpush.msra.mxu0 0.0
    %167 = vmatpush.msra.mxu0 0.0
    %168 = vmatpush.msra.mxu0 0.0
    %169 = vmatpush.msra.mxu0 0.0
    %170 = vmatpush.msra.mxu0 0.0
    %171 = vmatpush.msra.mxu0 0.0
    %172 = vmatpush.msra.mxu0 0.0
    %173 = vmatpush.msra.mxu0 0.0
    %174 = vmatpush.msra.mxu0 0.0
    %175 = vmatpush.msra.mxu0 0.0
    %176 = vmatpush.msra.mxu0 %v154
    %177 = vmatpush.msra.mxu0 %v153
    %178 = vmatpush.msra.mxu0 %v152
    %179 = vmatpush.msra.mxu0 %v151
    %180 = vmatmul.f32.gmra.mxu0 %v129
    %v181 = vpop.f32.mrf.mxu0
    %v182 = vadd.f32 %v149, %v181
    %183 = vdwg.mxu0
    %v184 = vxor.u32 %v182, 2147483648
    %v185 = vmul.f32 %v184, 1.442695
    %v186 = vpow.pop %v185
    %v187 = vadd.f32 %v186, 1.0
    %v188 = vrcp.pop %v187
    %v189 = vmul.f32 %v187, %v188
    %v190 = vsub.f32 1.0, %v189
    %v191 = vmul.f32 %v188, %v190
    %v192 = vadd.f32 %v188, %v191
    %vm193 = vweird.f32 %v187
    %vm194 = vweird.f32 %v188
    %vm195 = vmor %vm193, %vm194
    %v196 = vsel %vm195, %v188, %v192
    %v197 = vand.u32 2147483647, %v187
    %vm198 = vcmp.eq.f32.partialorder %v197, 8.507059e+37
    %v199 = vand.u32 %v187, 2147483648
    %v200 = vor.u32 1.1754944e-38, %v199
    %v201 = vsel %vm198, %v200, %v196
    %v202 = vmul.f32 1.0, %v201
    %v203 = vtanh.pop %v182
    %v204 = vmul.f32 %v202, 0.0
    %206 = vrot.lane.b32.xlu0 %v203, 64
    %v207 = vpop.permute.xlu0 %206
    %v209 = vmul.f32 %v202, %v207
    %211 = vrot.lane.b32.xlu0 %v209, 32
    %v212 = vpop.permute.xlu0 %211
    %v214 = vadd.f32 %v204, %v212
    %v215 = vtanh.pop %v214
    %217 = vrot.lane.b32.xlu0 %v215, 64
    %v218 = vpop.permute.xlu0 %217
    %v220 = vmul.f32 %v202, %v218
    %222 = vrot.lane.b32.xlu0 %v220, 32
    %v223 = vpop.permute.xlu0 %222
    %vm225 = vcmask 254976
    %226 = vst.msk [vmem:[#allocation3] sm:$0x3] %vm225, %v223
    %227 = vrot.lane.b32.xlu0 %v117, 32
    %v228 = vpop.permute.xlu0 %227
    %vm230 = vcmask 517376
    %231 = vst.msk [vmem:[#allocation3] sm:$0x3] %vm230, %v228
    %v232 = vld [vmem:[#allocation3] sm:$0x3]
    %v234 = vperm.slane %v163, 0
    %vm236 = vcmask 523264
    %v238 = vsel %vm236, %v232, 0
    %240 = vmatpush.msra.mxu0 0.0
    %241 = vmatpush.msra.mxu0 0.0
    %242 = vmatpush.msra.mxu0 0.0
    %243 = vmatpush.msra.mxu0 0.0
    %244 = vmatpush.msra.mxu0 0.0
    %245 = vmatpush.msra.mxu0 0.0
    %246 = vmatpush.msra.mxu0 0.0
    %247 = vmatpush.msra.mxu0 0.0
    %248 = vmatpush.msra.mxu0 %v162
    %249 = vmatpush.msra.mxu0 %v161
    %250 = vmatpush.msra.mxu0 %v160
    %251 = vmatpush.msra.mxu0 %v159
    %252 = vmatpush.msra.mxu0 %v158
    %253 = vmatpush.msra.mxu0 %v157
    %254 = vmatpush.msra.mxu0 %v156
    %255 = vmatpush.msra.mxu0 %v155
    %256 = vmatmul.f32.gmra.mxu0 %v238
    %v257 = vpop.f32.mrf.mxu0
    %v258 = vadd.f32 %v234, %v257
    %259 = vdwg.mxu0
    %v260 = vxor.u32 %v258, 2147483648
    %v261 = vmul.f32 %v260, 1.442695
    %v262 = vpow.pop %v261
    %v263 = vadd.f32 %v262, 1.0
    %v264 = vrcp.pop %v263
    %v265 = vmul.f32 %v263, %v264
    %v266 = vsub.f32 1.0, %v265
    %v267 = vmul.f32 %v264, %v266
    %v268 = vadd.f32 %v264, %v267
    %vm269 = vweird.f32 %v263
    %vm270 = vweird.f32 %v264
    %vm271 = vmor %vm269, %vm270
    %v272 = vsel %vm271, %v264, %v268
    %v273 = vand.u32 2147483647, %v263
    %vm274 = vcmp.eq.f32.partialorder %v273, 8.507059e+37
    %v275 = vand.u32 %v263, 2147483648
    %v276 = vor.u32 1.1754944e-38, %v275
    %v277 = vsel %vm274, %v276, %v272
    %v278 = vmul.f32 1.0, %v277
    %v279 = vtanh.pop %v258
    %v280 = vmul.f32 %v278, 0.0
    %282 = vrot.lane.b32.xlu0 %v279, 64
    %v283 = vpop.permute.xlu0 %282
    %v285 = vmul.f32 %v278, %v283
    %287 = vrot.lane.b32.xlu0 %v285, 32
    %v288 = vpop.permute.xlu0 %287
    %v290 = vadd.f32 %v280, %v288
    %v291 = vtanh.pop %v290
    %293 = vrot.lane.b32.xlu0 %v291, 64
    %v294 = vpop.permute.xlu0 %293
    %v296 = vmul.f32 %v278, %v294
    %298 = vrot.lane.b32.xlu0 %v296, 32
    %v299 = vpop.permute.xlu0 %298
    %301 = vst.msk [vmem:[#allocation2] sm:$0x3] %vm225, %v299
    %v302 = vsel %vm127, %v223, 0
    %304 = vmatpush.msra.mxu0 0.0
    %305 = vmatpush.msra.mxu0 0.0
    %306 = vmatpush.msra.mxu0 0.0
    %307 = vmatpush.msra.mxu0 0.0
    %308 = vmatpush.msra.mxu0 0.0
    %309 = vmatpush.msra.mxu0 0.0
    %310 = vmatpush.msra.mxu0 0.0
    %311 = vmatpush.msra.mxu0 0.0
    %312 = vmatpush.msra.mxu0 0.0
    %313 = vmatpush.msra.mxu0 0.0
    %314 = vmatpush.msra.mxu0 0.0
    %315 = vmatpush.msra.mxu0 0.0
    %316 = vmatpush.msra.mxu0 %v154
    %317 = vmatpush.msra.mxu0 %v153
    %318 = vmatpush.msra.mxu0 %v152
    %319 = vmatpush.msra.mxu0 %v151
    %320 = vmatmul.f32.gmra.mxu0 %v302
    %v321 = vpop.f32.mrf.mxu0
    %v322 = vadd.f32 %v149, %v321
    %323 = vdwg.mxu0
    %v324 = vxor.u32 %v322, 2147483648
    %v325 = vmul.f32 %v324, 1.442695
    %v326 = vpow.pop %v325
    %v327 = vadd.f32 %v326, 1.0
    %v328 = vrcp.pop %v327
    %v329 = vmul.f32 %v327, %v328
    %v330 = vsub.f32 1.0, %v329
    %v331 = vmul.f32 %v328, %v330
    %v332 = vadd.f32 %v328, %v331
    %vm333 = vweird.f32 %v327
    %vm334 = vweird.f32 %v328
    %vm335 = vmor %vm333, %vm334
    %v336 = vsel %vm335, %v328, %v332
    %v337 = vand.u32 2147483647, %v327
    %vm338 = vcmp.eq.f32.partialorder %v337, 8.507059e+37
    %v339 = vand.u32 %v327, 2147483648
    %v340 = vor.u32 1.1754944e-38, %v339
    %v341 = vsel %vm338, %v340, %v336
    %v342 = vmul.f32 1.0, %v341
    %v343 = vtanh.pop %v322
    %v344 = vmul.f32 %v342, %v214
    %346 = vrot.lane.b32.xlu0 %v343, 64
    %v347 = vpop.permute.xlu0 %346
    %v349 = vmul.f32 %v342, %v347
    %351 = vrot.lane.b32.xlu0 %v349, 32
    %v352 = vpop.permute.xlu0 %351
    %v354 = vadd.f32 %v344, %v352
    %v355 = vtanh.pop %v354
    %357 = vrot.lane.b32.xlu0 %v355, 64
    %v358 = vpop.permute.xlu0 %357
    %v360 = vmul.f32 %v342, %v358
    %362 = vrot.lane.b32.xlu0 %v360, 32
    %v363 = vpop.permute.xlu0 %362
    %365 = vst.msk [vmem:[#allocation3] sm:$0x3] %vm225, %v363
    %366 = vrot.lane.b32.xlu0 %v296, 64
    %v367 = vpop.permute.xlu0 %366
    %369 = vst.msk [vmem:[#allocation3] sm:$0x3] %vm230, %v367
    %v370 = vld [vmem:[#allocation3] sm:$0x3]
    %v372 = vsel %vm236, %v370, 0
    %374 = vmatpush.msra.mxu0 0.0
    %375 = vmatpush.msra.mxu0 0.0
    %376 = vmatpush.msra.mxu0 0.0
    %377 = vmatpush.msra.mxu0 0.0
    %378 = vmatpush.msra.mxu0 0.0
    %379 = vmatpush.msra.mxu0 0.0
    %380 = vmatpush.msra.mxu0 0.0
    %381 = vmatpush.msra.mxu0 0.0
    %382 = vmatpush.msra.mxu0 %v162
    %383 = vmatpush.msra.mxu0 %v161
    %384 = vmatpush.msra.mxu0 %v160
    %385 = vmatpush.msra.mxu0 %v159
    %386 = vmatpush.msra.mxu0 %v158
    %387 = vmatpush.msra.mxu0 %v157
    %388 = vmatpush.msra.mxu0 %v156
    %389 = vmatpush.msra.mxu0 %v155
    %390 = vmatmul.f32.gmra.mxu0 %v372
    %v391 = vpop.f32.mrf.mxu0
    %v392 = vadd.f32 %v234, %v391
    %393 = vdwg.mxu0
    %v394 = vxor.u32 %v392, 2147483648
    %v395 = vmul.f32 %v394, 1.442695
    %v396 = vpow.pop %v395
    %v397 = vadd.f32 %v396, 1.0
    %v398 = vrcp.pop %v397
    %v399 = vmul.f32 %v397, %v398
    %v400 = vsub.f32 1.0, %v399
    %v401 = vmul.f32 %v398, %v400
    %v402 = vadd.f32 %v398, %v401
    %vm403 = vweird.f32 %v397
    %vm404 = vweird.f32 %v398
    %vm405 = vmor %vm403, %vm404
    %v406 = vsel %vm405, %v398, %v402
    %v407 = vand.u32 2147483647, %v397
    %vm408 = vcmp.eq.f32.partialorder %v407, 8.507059e+37
    %v409 = vand.u32 %v397, 2147483648
    %v410 = vor.u32 1.1754944e-38, %v409
    %v411 = vsel %vm408, %v410, %v406
    %v412 = vmul.f32 1.0, %v411
    %v413 = vtanh.pop %v392
    %v414 = vmul.f32 %v412, %v290
    %416 = vrot.lane.b32.xlu0 %v413, 64
    %v417 = vpop.permute.xlu0 %416
    %v419 = vmul.f32 %v412, %v417
    %421 = vrot.lane.b32.xlu0 %v419, 32
    %v422 = vpop.permute.xlu0 %421
    %v424 = vadd.f32 %v414, %v422
    %v425 = vtanh.pop %v424
    %427 = vrot.lane.b32.xlu0 %v425, 64
    %v428 = vpop.permute.xlu0 %427
    %v430 = vmul.f32 %v412, %v428
    %432 = vrot.lane.b32.xlu0 %v430, 32
    %v433 = vpop.permute.xlu0 %432
    %435 = vst.msk [vmem:[#allocation2 + $0x2] sm:$0x3] %vm225, %v433
    %v436 = vsel %vm127, %v363, 0
    %438 = vmatpush.msra.mxu0 0.0
    %439 = vmatpush.msra.mxu0 0.0
    %440 = vmatpush.msra.mxu0 0.0
    %441 = vmatpush.msra.mxu0 0.0
    %442 = vmatpush.msra.mxu0 0.0
    %443 = vmatpush.msra.mxu0 0.0
    %444 = vmatpush.msra.mxu0 0.0
    %445 = vmatpush.msra.mxu0 0.0
    %446 = vmatpush.msra.mxu0 0.0
    %447 = vmatpush.msra.mxu0 0.0
    %448 = vmatpush.msra.mxu0 0.0
    %449 = vmatpush.msra.mxu0 0.0
    %450 = vmatpush.msra.mxu0 %v154
    %451 = vmatpush.msra.mxu0 %v153
    %452 = vmatpush.msra.mxu0 %v152
    %453 = vmatpush.msra.mxu0 %v151
    %454 = vmatmul.f32.gmra.mxu0 %v436
    %v455 = vpop.f32.mrf.mxu0
    %v456 = vadd.f32 %v149, %v455
    %457 = vdwg.mxu0
    %v458 = vxor.u32 %v456, 2147483648
    %v459 = vmul.f32 %v458, 1.442695
    %v460 = vpow.pop %v459
    %v461 = vadd.f32 %v460, 1.0
    %v462 = vrcp.pop %v461
    %v463 = vmul.f32 %v461, %v462
    %v464 = vsub.f32 1.0, %v463
    %v465 = vmul.f32 %v462, %v464
    %v466 = vadd.f32 %v462, %v465
    %vm467 = vweird.f32 %v461
    %vm468 = vweird.f32 %v462
    %vm469 = vmor %vm467, %vm468
    %v470 = vsel %vm469, %v462, %v466
    %v471 = vand.u32 2147483647, %v461
    %vm472 = vcmp.eq.f32.partialorder %v471, 8.507059e+37
    %v473 = vand.u32 %v461, 2147483648
    %v474 = vor.u32 1.1754944e-38, %v473
    %v475 = vsel %vm472, %v474, %v470
    %v476 = vmul.f32 1.0, %v475
    %v477 = vtanh.pop %v456
    %v478 = vmul.f32 %v476, %v354
    %480 = vrot.lane.b32.xlu0 %v477, 64
    %v481 = vpop.permute.xlu0 %480
    %v483 = vmul.f32 %v476, %v481
    %485 = vrot.lane.b32.xlu0 %v483, 32
    %v486 = vpop.permute.xlu0 %485
    %v488 = vadd.f32 %v478, %v486
    %v489 = vtanh.pop %v488
    %491 = vrot.lane.b32.xlu0 %v489, 64
    %v492 = vpop.permute.xlu0 %491
    %v494 = vmul.f32 %v476, %v492
    %496 = vrot.lane.b32.xlu0 %v494, 32
    %v497 = vpop.permute.xlu0 %496
    %499 = vst.msk [vmem:[#allocation3] sm:$0x3] %vm225, %v497
    %500 = vrot.lane.b32.xlu0 %v430, 64
    %v501 = vpop.permute.xlu0 %500
    %503 = vst.msk [vmem:[#allocation3] sm:$0x3] %vm230, %v501
    %v504 = vld [vmem:[#allocation3] sm:$0x3]
    %v506 = vsel %vm236, %v504, 0
    %508 = vmatpush.msra.mxu0 0.0
    %509 = vmatpush.msra.mxu0 0.0
    %510 = vmatpush.msra.mxu0 0.0
    %511 = vmatpush.msra.mxu0 0.0
    %512 = vmatpush.msra.mxu0 0.0
    %513 = vmatpush.msra.mxu0 0.0
    %514 = vmatpush.msra.mxu0 0.0
    %515 = vmatpush.msra.mxu0 0.0
    %516 = vmatpush.msra.mxu0 %v162
    %517 = vmatpush.msra.mxu0 %v161
    %518 = vmatpush.msra.mxu0 %v160
    %519 = vmatpush.msra.mxu0 %v159
    %520 = vmatpush.msra.mxu0 %v158
    %521 = vmatpush.msra.mxu0 %v157
    %522 = vmatpush.msra.mxu0 %v156
    %523 = vmatpush.msra.mxu0 %v155
    %524 = vmatmul.f32.gmra.mxu0 %v506
    %v525 = vpop.f32.mrf.mxu0
    %v526 = vadd.f32 %v234, %v525
    %527 = vdwg.mxu0
    %v528 = vxor.u32 %v526, 2147483648
    %v529 = vmul.f32 %v528, 1.442695
    %v530 = vpow.pop %v529
    %v531 = vadd.f32 %v530, 1.0
    %v532 = vrcp.pop %v531
    %v533 = vmul.f32 %v531, %v532
    %v534 = vsub.f32 1.0, %v533
    %v535 = vmul.f32 %v532, %v534
    %v536 = vadd.f32 %v532, %v535
    %vm537 = vweird.f32 %v531
    %vm538 = vweird.f32 %v532
    %vm539 = vmor %vm537, %vm538
    %v540 = vsel %vm539, %v532, %v536
    %v541 = vand.u32 2147483647, %v531
    %vm542 = vcmp.eq.f32.partialorder %v541, 8.507059e+37
    %v543 = vand.u32 %v531, 2147483648
    %v544 = vor.u32 1.1754944e-38, %v543
    %v545 = vsel %vm542, %v544, %v540
    %v546 = vmul.f32 1.0, %v545
    %v547 = vtanh.pop %v526
    %v548 = vmul.f32 %v546, %v424
    %550 = vrot.lane.b32.xlu0 %v547, 64
    %v551 = vpop.permute.xlu0 %550
    %v553 = vmul.f32 %v546, %v551
    %555 = vrot.lane.b32.xlu0 %v553, 32
    %v556 = vpop.permute.xlu0 %555
    %v558 = vadd.f32 %v548, %v556
    %v559 = vtanh.pop %v558
    %561 = vrot.lane.b32.xlu0 %v559, 64
    %v562 = vpop.permute.xlu0 %561
    %v564 = vmul.f32 %v546, %v562
    %566 = vrot.lane.b32.xlu0 %v564, 32
    %v567 = vpop.permute.xlu0 %566
    %569 = vst.msk [vmem:[#allocation2 + $0x4] sm:$0x3] %vm225, %v567
    %v570 = vsel %vm127, %v497, 0
    %572 = vmatpush.msra.mxu0 0.0
    %573 = vmatpush.msra.mxu0 0.0
    %574 = vmatpush.msra.mxu0 0.0
    %575 = vmatpush.msra.mxu0 0.0
    %576 = vmatpush.msra.mxu0 0.0
    %577 = vmatpush.msra.mxu0 0.0
    %578 = vmatpush.msra.mxu0 0.0
    %579 = vmatpush.msra.mxu0 0.0
    %580 = vmatpush.msra.mxu0 0.0
    %581 = vmatpush.msra.mxu0 0.0
    %582 = vmatpush.msra.mxu0 0.0
    %583 = vmatpush.msra.mxu0 0.0
    %584 = vmatpush.msra.mxu0 %v154
    %585 = vmatpush.msra.mxu0 %v153
    %586 = vmatpush.msra.mxu0 %v152
    %587 = vmatpush.msra.mxu0 %v151
    %588 = vmatmul.f32.gmra.mxu0 %v570
    %v589 = vpop.f32.mrf.mxu0
    %v590 = vadd.f32 %v149, %v589
    %591 = vdwg.mxu0
    %v592 = vxor.u32 %v590, 2147483648
    %v593 = vmul.f32 %v592, 1.442695
    %v594 = vpow.pop %v593
    %v595 = vadd.f32 %v594, 1.0
    %v596 = vrcp.pop %v595
    %v597 = vmul.f32 %v595, %v596
    %v598 = vsub.f32 1.0, %v597
    %v599 = vmul.f32 %v596, %v598
    %v600 = vadd.f32 %v596, %v599
    %vm601 = vweird.f32 %v595
    %vm602 = vweird.f32 %v596
    %vm603 = vmor %vm601, %vm602
    %v604 = vsel %vm603, %v596, %v600
    %v605 = vand.u32 2147483647, %v595
    %vm606 = vcmp.eq.f32.partialorder %v605, 8.507059e+37
    %v607 = vand.u32 %v595, 2147483648
    %v608 = vor.u32 1.1754944e-38, %v607
    %v609 = vsel %vm606, %v608, %v604
    %v610 = vmul.f32 1.0, %v609
    %v611 = vtanh.pop %v590
    %v612 = vmul.f32 %v610, %v488
    %614 = vrot.lane.b32.xlu0 %v611, 64
    %v615 = vpop.permute.xlu0 %614
    %v617 = vmul.f32 %v610, %v615
    %619 = vrot.lane.b32.xlu0 %v617, 32
    %v620 = vpop.permute.xlu0 %619
    %v622 = vadd.f32 %v612, %v620
    %v623 = vtanh.pop %v622
    %625 = vrot.lane.b32.xlu0 %v623, 64
    %v626 = vpop.permute.xlu0 %625
    %v628 = vmul.f32 %v610, %v626
    %630 = vrot.lane.b32.xlu0 %v628, 32
    %v631 = vpop.permute.xlu0 %630
    %633 = vst.msk [vmem:[#allocation3] sm:$0x3] %vm225, %v631
    %634 = vrot.lane.b32.xlu0 %v564, 64
    %v635 = vpop.permute.xlu0 %634
    %637 = vst.msk [vmem:[#allocation3] sm:$0x3] %vm230, %v635
    %v638 = vld [vmem:[#allocation3] sm:$0x3]
    %v640 = vsel %vm236, %v638, 0
    %642 = vmatpush.msra.mxu0 0.0
    %643 = vmatpush.msra.mxu0 0.0
    %644 = vmatpush.msra.mxu0 0.0
    %645 = vmatpush.msra.mxu0 0.0
    %646 = vmatpush.msra.mxu0 0.0
    %647 = vmatpush.msra.mxu0 0.0
    %648 = vmatpush.msra.mxu0 0.0
    %649 = vmatpush.msra.mxu0 0.0
    %650 = vmatpush.msra.mxu0 %v162
    %651 = vmatpush.msra.mxu0 %v161
    %652 = vmatpush.msra.mxu0 %v160
    %653 = vmatpush.msra.mxu0 %v159
    %654 = vmatpush.msra.mxu0 %v158
    %655 = vmatpush.msra.mxu0 %v157
    %656 = vmatpush.msra.mxu0 %v156
    %657 = vmatpush.msra.mxu0 %v155
    %658 = vmatmul.f32.gmra.mxu0 %v640
    %v659 = vpop.f32.mrf.mxu0
    %v660 = vadd.f32 %v234, %v659
    %661 = vdwg.mxu0
    %v662 = vxor.u32 %v660, 2147483648
    %v663 = vmul.f32 %v662, 1.442695
    %v664 = vpow.pop %v663
    %v665 = vadd.f32 %v664, 1.0
    %v666 = vrcp.pop %v665
    %v667 = vmul.f32 %v665, %v666
    %v668 = vsub.f32 1.0, %v667
    %v669 = vmul.f32 %v666, %v668
    %v670 = vadd.f32 %v666, %v669
    %vm671 = vweird.f32 %v665
    %vm672 = vweird.f32 %v666
    %vm673 = vmor %vm671, %vm672
    %v674 = vsel %vm673, %v666, %v670
    %v675 = vand.u32 2147483647, %v665
    %vm676 = vcmp.eq.f32.partialorder %v675, 8.507059e+37
    %v677 = vand.u32 %v665, 2147483648
    %v678 = vor.u32 1.1754944e-38, %v677
    %v679 = vsel %vm676, %v678, %v674
    %v680 = vmul.f32 1.0, %v679
    %v681 = vtanh.pop %v660
    %v682 = vmul.f32 %v680, %v558
    %684 = vrot.lane.b32.xlu0 %v681, 64
    %v685 = vpop.permute.xlu0 %684
    %v687 = vmul.f32 %v680, %v685
    %689 = vrot.lane.b32.xlu0 %v687, 32
    %v690 = vpop.permute.xlu0 %689
    %v692 = vadd.f32 %v682, %v690
    %v693 = vtanh.pop %v692
    %695 = vrot.lane.b32.xlu0 %v693, 64
    %v696 = vpop.permute.xlu0 %695
    %v698 = vmul.f32 %v680, %v696
    %700 = vrot.lane.b32.xlu0 %v698, 32
    %v701 = vpop.permute.xlu0 %700
    %703 = vst.msk [vmem:[#allocation2 + $0x6] sm:$0x3] %vm225, %v701
    %v704 = vsel %vm127, %v631, 0
    %706 = vmatpush.msra.mxu0 0.0
    %707 = vmatpush.msra.mxu0 0.0
    %708 = vmatpush.msra.mxu0 0.0
    %709 = vmatpush.msra.mxu0 0.0
    %710 = vmatpush.msra.mxu0 0.0
    %711 = vmatpush.msra.mxu0 0.0
    %712 = vmatpush.msra.mxu0 0.0
    %713 = vmatpush.msra.mxu0 0.0
    %714 = vmatpush.msra.mxu0 0.0
    %715 = vmatpush.msra.mxu0 0.0
    %716 = vmatpush.msra.mxu0 0.0
    %717 = vmatpush.msra.mxu0 0.0
    %718 = vmatpush.msra.mxu0 %v154
    %719 = vmatpush.msra.mxu0 %v153
    %720 = vmatpush.msra.mxu0 %v152
    %721 = vmatpush.msra.mxu0 %v151
    %722 = vmatmul.f32.gmra.mxu0 %v704
    %v723 = vpop.f32.mrf.mxu0
    %v724 = vadd.f32 %v149, %v723
    %725 = vdwg.mxu0
    %v726 = vxor.u32 %v724, 2147483648
    %v727 = vmul.f32 %v726, 1.442695
    %v728 = vpow.pop %v727
    %v729 = vadd.f32 %v728, 1.0
    %v730 = vrcp.pop %v729
    %v731 = vmul.f32 %v729, %v730
    %v732 = vsub.f32 1.0, %v731
    %v733 = vmul.f32 %v730, %v732
    %v734 = vadd.f32 %v730, %v733
    %vm735 = vweird.f32 %v729
    %vm736 = vweird.f32 %v730
    %vm737 = vmor %vm735, %vm736
    %v738 = vsel %vm737, %v730, %v734
    %v739 = vand.u32 2147483647, %v729
    %vm740 = vcmp.eq.f32.partialorder %v739, 8.507059e+37
    %v741 = vand.u32 %v729, 2147483648
    %v742 = vor.u32 1.1754944e-38, %v741
    %v743 = vsel %vm740, %v742, %v738
    %v744 = vmul.f32 1.0, %v743
    %v745 = vtanh.pop %v724
    %v746 = vmul.f32 %v744, %v622
    %748 = vrot.lane.b32.xlu0 %v745, 64
    %v749 = vpop.permute.xlu0 %748
    %v751 = vmul.f32 %v744, %v749
    %753 = vrot.lane.b32.xlu0 %v751, 32
    %v754 = vpop.permute.xlu0 %753
    %v756 = vadd.f32 %v746, %v754
    %v757 = vtanh.pop %v756
    %759 = vrot.lane.b32.xlu0 %v757, 64
    %v760 = vpop.permute.xlu0 %759
    %v762 = vmul.f32 %v744, %v760
    %764 = vrot.lane.b32.xlu0 %v762, 32
    %v765 = vpop.permute.xlu0 %764
    %767 = vst.msk [vmem:[#allocation3] sm:$0x3] %vm225, %v765
    %768 = vrot.lane.b32.xlu0 %v698, 64
    %v769 = vpop.permute.xlu0 %768
    %771 = vst.msk [vmem:[#allocation3] sm:$0x3] %vm230, %v769
    %v772 = vld [vmem:[#allocation3] sm:$0x3]
    %v774 = vsel %vm236, %v772, 0
    %776 = vmatpush.msra.mxu0 0.0
    %777 = vmatpush.msra.mxu0 0.0
    %778 = vmatpush.msra.mxu0 0.0
    %779 = vmatpush.msra.mxu0 0.0
    %780 = vmatpush.msra.mxu0 0.0
    %781 = vmatpush.msra.mxu0 0.0
    %782 = vmatpush.msra.mxu0 0.0
    %783 = vmatpush.msra.mxu0 0.0
    %784 = vmatpush.msra.mxu0 %v162
    %785 = vmatpush.msra.mxu0 %v161
    %786 = vmatpush.msra.mxu0 %v160
    %787 = vmatpush.msra.mxu0 %v159
    %788 = vmatpush.msra.mxu0 %v158
    %789 = vmatpush.msra.mxu0 %v157
    %790 = vmatpush.msra.mxu0 %v156
    %791 = vmatpush.msra.mxu0 %v155
    %792 = vmatmul.f32.gmra.mxu0 %v774
    %v793 = vpop.f32.mrf.mxu0
    %v794 = vadd.f32 %v234, %v793
    %795 = vdwg.mxu0
    %v796 = vxor.u32 %v794, 2147483648
    %v797 = vmul.f32 %v796, 1.442695
    %v798 = vpow.pop %v797
    %v799 = vadd.f32 %v798, 1.0
    %v800 = vrcp.pop %v799
    %v801 = vmul.f32 %v799, %v800
    %v802 = vsub.f32 1.0, %v801
    %v803 = vmul.f32 %v800, %v802
    %v804 = vadd.f32 %v800, %v803
    %vm805 = vweird.f32 %v799
    %vm806 = vweird.f32 %v800
    %vm807 = vmor %vm805, %vm806
    %v808 = vsel %vm807, %v800, %v804
    %v809 = vand.u32 2147483647, %v799
    %vm810 = vcmp.eq.f32.partialorder %v809, 8.507059e+37
    %v811 = vand.u32 %v799, 2147483648
    %v812 = vor.u32 1.1754944e-38, %v811
    %v813 = vsel %vm810, %v812, %v808
    %v814 = vmul.f32 1.0, %v813
    %v815 = vtanh.pop %v794
    %v816 = vmul.f32 %v814, %v692
    %818 = vrot.lane.b32.xlu0 %v815, 64
    %v819 = vpop.permute.xlu0 %818
    %v821 = vmul.f32 %v814, %v819
    %823 = vrot.lane.b32.xlu0 %v821, 32
    %v824 = vpop.permute.xlu0 %823
    %v826 = vadd.f32 %v816, %v824
    %v827 = vtanh.pop %v826
    %829 = vrot.lane.b32.xlu0 %v827, 64
    %v830 = vpop.permute.xlu0 %829
    %v832 = vmul.f32 %v814, %v830
    %834 = vrot.lane.b32.xlu0 %v832, 32
    %v835 = vpop.permute.xlu0 %834
    %837 = vst.msk [vmem:[#allocation2 + $0x8] sm:$0x3] %vm225, %v835
    %v838 = vsel %vm127, %v765, 0
    %840 = vmatpush.msra.mxu0 0.0
    %841 = vmatpush.msra.mxu0 0.0
    %842 = vmatpush.msra.mxu0 0.0
    %843 = vmatpush.msra.mxu0 0.0
    %844 = vmatpush.msra.mxu0 0.0
    %845 = vmatpush.msra.mxu0 0.0
    %846 = vmatpush.msra.mxu0 0.0
    %847 = vmatpush.msra.mxu0 0.0
    %848 = vmatpush.msra.mxu0 0.0
    %849 = vmatpush.msra.mxu0 0.0
    %850 = vmatpush.msra.mxu0 0.0
    %851 = vmatpush.msra.mxu0 0.0
    %852 = vmatpush.msra.mxu0 %v154
    %853 = vmatpush.msra.mxu0 %v153
    %854 = vmatpush.msra.mxu0 %v152
    %855 = vmatpush.msra.mxu0 %v151
    %856 = vmatmul.f32.gmra.mxu0 %v838
    %v857 = vpop.f32.mrf.mxu0
    %v858 = vadd.f32 %v149, %v857
    %859 = vdwg.mxu0
    %v860 = vxor.u32 %v858, 2147483648
    %v861 = vmul.f32 %v860, 1.442695
    %v862 = vpow.pop %v861
    %v863 = vadd.f32 %v862, 1.0
    %v864 = vrcp.pop %v863
    %v865 = vmul.f32 %v863, %v864
    %v866 = vsub.f32 1.0, %v865
    %v867 = vmul.f32 %v864, %v866
    %v868 = vadd.f32 %v864, %v867
    %vm869 = vweird.f32 %v863
    %vm870 = vweird.f32 %v864
    %vm871 = vmor %vm869, %vm870
    %v872 = vsel %vm871, %v864, %v868
    %v873 = vand.u32 2147483647, %v863
    %vm874 = vcmp.eq.f32.partialorder %v873, 8.507059e+37
    %v875 = vand.u32 %v863, 2147483648
    %v876 = vor.u32 1.1754944e-38, %v875
    %v877 = vsel %vm874, %v876, %v872
    %v878 = vmul.f32 1.0, %v877
    %v879 = vtanh.pop %v858
    %v880 = vmul.f32 %v878, %v756
    %882 = vrot.lane.b32.xlu0 %v879, 64
    %v883 = vpop.permute.xlu0 %882
    %v885 = vmul.f32 %v878, %v883
    %887 = vrot.lane.b32.xlu0 %v885, 32
    %v888 = vpop.permute.xlu0 %887
    %v890 = vadd.f32 %v880, %v888
    %v891 = vtanh.pop %v890
    %893 = vrot.lane.b32.xlu0 %v891, 64
    %v894 = vpop.permute.xlu0 %893
    %v896 = vmul.f32 %v878, %v894
    %898 = vrot.lane.b32.xlu0 %v896, 32
    %v899 = vpop.permute.xlu0 %898
    %901 = vst.msk [vmem:[#allocation3] sm:$0x3] %vm225, %v899
    %902 = vrot.lane.b32.xlu0 %v832, 64
    %v903 = vpop.permute.xlu0 %902
    %905 = vst.msk [vmem:[#allocation3] sm:$0x3] %vm230, %v903
    %v906 = vld [vmem:[#allocation3] sm:$0x3]
    %v908 = vsel %vm236, %v906, 0
    %910 = vmatpush.msra.mxu0 0.0
    %911 = vmatpush.msra.mxu0 0.0
    %912 = vmatpush.msra.mxu0 0.0
    %913 = vmatpush.msra.mxu0 0.0
    %914 = vmatpush.msra.mxu0 0.0
    %915 = vmatpush.msra.mxu0 0.0
    %916 = vmatpush.msra.mxu0 0.0
    %917 = vmatpush.msra.mxu0 0.0
    %918 = vmatpush.msra.mxu0 %v162
    %919 = vmatpush.msra.mxu0 %v161
    %920 = vmatpush.msra.mxu0 %v160
    %921 = vmatpush.msra.mxu0 %v159
    %922 = vmatpush.msra.mxu0 %v158
    %923 = vmatpush.msra.mxu0 %v157
    %924 = vmatpush.msra.mxu0 %v156
    %925 = vmatpush.msra.mxu0 %v155
    %926 = vmatmul.f32.gmra.mxu0 %v908
    %v927 = vpop.f32.mrf.mxu0
    %v928 = vadd.f32 %v234, %v927
    %929 = vdwg.mxu0
    %v930 = vxor.u32 %v928, 2147483648
    %v931 = vmul.f32 %v930, 1.442695
    %v932 = vpow.pop %v931
    %v933 = vadd.f32 %v932, 1.0
    %v934 = vrcp.pop %v933
    %v935 = vmul.f32 %v933, %v934
    %v936 = vsub.f32 1.0, %v935
    %v937 = vmul.f32 %v934, %v936
    %v938 = vadd.f32 %v934, %v937
    %vm939 = vweird.f32 %v933
    %vm940 = vweird.f32 %v934
    %vm941 = vmor %vm939, %vm940
    %v942 = vsel %vm941, %v934, %v938
    %v943 = vand.u32 2147483647, %v933
    %vm944 = vcmp.eq.f32.partialorder %v943, 8.507059e+37
    %v945 = vand.u32 %v933, 2147483648
    %v946 = vor.u32 1.1754944e-38, %v945
    %v947 = vsel %vm944, %v946, %v942
    %v948 = vmul.f32 1.0, %v947
    %v949 = vtanh.pop %v928
    %v950 = vmul.f32 %v948, %v826
    %952 = vrot.lane.b32.xlu0 %v949, 64
    %v953 = vpop.permute.xlu0 %952
    %v955 = vmul.f32 %v948, %v953
    %957 = vrot.lane.b32.xlu0 %v955, 32
    %v958 = vpop.permute.xlu0 %957
    %v960 = vadd.f32 %v950, %v958
    %v961 = vtanh.pop %v960
    %963 = vrot.lane.b32.xlu0 %v961, 64
    %v964 = vpop.permute.xlu0 %963
    %v966 = vmul.f32 %v948, %v964
    %968 = vrot.lane.b32.xlu0 %v966, 32
    %v969 = vpop.permute.xlu0 %968
    %971 = vst.msk [vmem:[#allocation2 + $0xa] sm:$0x3] %vm225, %v969
    %v972 = vsel %vm127, %v899, 0
    %974 = vmatpush.msra.mxu0 0.0
    %975 = vmatpush.msra.mxu0 0.0
    %976 = vmatpush.msra.mxu0 0.0
    %977 = vmatpush.msra.mxu0 0.0
    %978 = vmatpush.msra.mxu0 0.0
    %979 = vmatpush.msra.mxu0 0.0
    %980 = vmatpush.msra.mxu0 0.0
    %981 = vmatpush.msra.mxu0 0.0
    %982 = vmatpush.msra.mxu0 0.0
    %983 = vmatpush.msra.mxu0 0.0
    %984 = vmatpush.msra.mxu0 0.0
    %985 = vmatpush.msra.mxu0 0.0
    %986 = vmatpush.msra.mxu0 %v154
    %987 = vmatpush.msra.mxu0 %v153
    %988 = vmatpush.msra.mxu0 %v152
    %989 = vmatpush.msra.mxu0 %v151
    %990 = vmatmul.f32.gmra.mxu0 %v972
    %v991 = vpop.f32.mrf.mxu0
    %v992 = vadd.f32 %v149, %v991
    %993 = vdwg.mxu0
    %v994 = vxor.u32 %v992, 2147483648
    %v995 = vmul.f32 %v994, 1.442695
    %v996 = vpow.pop %v995
    %v997 = vadd.f32 %v996, 1.0
    %v998 = vrcp.pop %v997
    %v999 = vmul.f32 %v997, %v998
    %v1000 = vsub.f32 1.0, %v999
    %v1001 = vmul.f32 %v998, %v1000
    %v1002 = vadd.f32 %v998, %v1001
    %vm1003 = vweird.f32 %v997
    %vm1004 = vweird.f32 %v998
    %vm1005 = vmor %vm1003, %vm1004
    %v1006 = vsel %vm1005, %v998, %v1002
    %v1007 = vand.u32 2147483647, %v997
    %vm1008 = vcmp.eq.f32.partialorder %v1007, 8.507059e+37
    %v1009 = vand.u32 %v997, 2147483648
    %v1010 = vor.u32 1.1754944e-38, %v1009
    %v1011 = vsel %vm1008, %v1010, %v1006
    %v1012 = vmul.f32 1.0, %v1011
    %v1013 = vtanh.pop %v992
    %v1014 = vmul.f32 %v1012, %v890
    %1016 = vrot.lane.b32.xlu0 %v1013, 64
    %v1017 = vpop.permute.xlu0 %1016
    %v1019 = vmul.f32 %v1012, %v1017
    %1021 = vrot.lane.b32.xlu0 %v1019, 32
    %v1022 = vpop.permute.xlu0 %1021
    %v1024 = vadd.f32 %v1014, %v1022
    %v1025 = vtanh.pop %v1024
    %1027 = vrot.lane.b32.xlu0 %v1025, 64
    %v1028 = vpop.permute.xlu0 %1027
    %v1030 = vmul.f32 %v1012, %v1028
    %1032 = vrot.lane.b32.xlu0 %v1030, 32
    %v1033 = vpop.permute.xlu0 %1032
    %1035 = vst.msk [vmem:[#allocation3] sm:$0x3] %vm225, %v1033
    %1036 = vrot.lane.b32.xlu0 %v966, 64
    %v1037 = vpop.permute.xlu0 %1036
    %1039 = vst.msk [vmem:[#allocation3] sm:$0x3] %vm230, %v1037
    %v1040 = vld [vmem:[#allocation3] sm:$0x3]
    %v1042 = vsel %vm236, %v1040, 0
    %1044 = vmatpush.msra.mxu0 0.0
    %1045 = vmatpush.msra.mxu0 0.0
    %1046 = vmatpush.msra.mxu0 0.0
    %1047 = vmatpush.msra.mxu0 0.0
    %1048 = vmatpush.msra.mxu0 0.0
    %1049 = vmatpush.msra.mxu0 0.0
    %1050 = vmatpush.msra.mxu0 0.0
    %1051 = vmatpush.msra.mxu0 0.0
    %1052 = vmatpush.msra.mxu0 %v162
    %1053 = vmatpush.msra.mxu0 %v161
    %1054 = vmatpush.msra.mxu0 %v160
    %1055 = vmatpush.msra.mxu0 %v159
    %1056 = vmatpush.msra.mxu0 %v158
    %1057 = vmatpush.msra.mxu0 %v157
    %1058 = vmatpush.msra.mxu0 %v156
    %1059 = vmatpush.msra.mxu0 %v155
    %1060 = vmatmul.f32.gmra.mxu0 %v1042
    %v1061 = vpop.f32.mrf.mxu0
    %v1062 = vadd.f32 %v234, %v1061
    %1063 = vdwg.mxu0
    %v1064 = vxor.u32 %v1062, 2147483648
    %v1065 = vmul.f32 %v1064, 1.442695
    %v1066 = vpow.pop %v1065
    %v1067 = vadd.f32 %v1066, 1.0
    %v1068 = vrcp.pop %v1067
    %v1069 = vmul.f32 %v1067, %v1068
    %v1070 = vsub.f32 1.0, %v1069
    %v1071 = vmul.f32 %v1068, %v1070
    %v1072 = vadd.f32 %v1068, %v1071
    %vm1073 = vweird.f32 %v1067
    %vm1074 = vweird.f32 %v1068
    %vm1075 = vmor %vm1073, %vm1074
    %v1076 = vsel %vm1075, %v1068, %v1072
    %v1077 = vand.u32 2147483647, %v1067
    %vm1078 = vcmp.eq.f32.partialorder %v1077, 8.507059e+37
    %v1079 = vand.u32 %v1067, 2147483648
    %v1080 = vor.u32 1.1754944e-38, %v1079
    %v1081 = vsel %vm1078, %v1080, %v1076
    %v1082 = vmul.f32 1.0, %v1081
    %v1083 = vtanh.pop %v1062
    %v1084 = vmul.f32 %v1082, %v960
    %1086 = vrot.lane.b32.xlu0 %v1083, 64
    %v1087 = vpop.permute.xlu0 %1086
    %v1089 = vmul.f32 %v1082, %v1087
    %1091 = vrot.lane.b32.xlu0 %v1089, 32
    %v1092 = vpop.permute.xlu0 %1091
    %v1094 = vadd.f32 %v1084, %v1092
    %v1095 = vtanh.pop %v1094
    %1097 = vrot.lane.b32.xlu0 %v1095, 64
    %v1098 = vpop.permute.xlu0 %1097
    %v1100 = vmul.f32 %v1082, %v1098
    %1102 = vrot.lane.b32.xlu0 %v1100, 32
    %v1103 = vpop.permute.xlu0 %1102
    %1105 = vst.msk [vmem:[#allocation2 + $0xc] sm:$0x3] %vm225, %v1103
    %v1106 = vsel %vm127, %v1033, 0
    %1108 = vmatpush.msra.mxu0 0.0
    %1109 = vmatpush.msra.mxu0 0.0
    %1110 = vmatpush.msra.mxu0 0.0
    %1111 = vmatpush.msra.mxu0 0.0
    %1112 = vmatpush.msra.mxu0 0.0
    %1113 = vmatpush.msra.mxu0 0.0
    %1114 = vmatpush.msra.mxu0 0.0
    %1115 = vmatpush.msra.mxu0 0.0
    %1116 = vmatpush.msra.mxu0 0.0
    %1117 = vmatpush.msra.mxu0 0.0
    %1118 = vmatpush.msra.mxu0 0.0
    %1119 = vmatpush.msra.mxu0 0.0
    %1120 = vmatpush.msra.mxu0 %v154
    %1121 = vmatpush.msra.mxu0 %v153
    %1122 = vmatpush.msra.mxu0 %v152
    %1123 = vmatpush.msra.mxu0 %v151
    %1124 = vmatmul.f32.gmra.mxu0 %v1106
    %v1125 = vpop.f32.mrf.mxu0
    %v1126 = vadd.f32 %v149, %v1125
    %1127 = vdwg.mxu0
    %v1128 = vxor.u32 %v1126, 2147483648
    %v1129 = vmul.f32 %v1128, 1.442695
    %v1130 = vpow.pop %v1129
    %v1131 = vadd.f32 %v1130, 1.0
    %v1132 = vrcp.pop %v1131
    %v1133 = vmul.f32 %v1131, %v1132
    %v1134 = vsub.f32 1.0, %v1133
    %v1135 = vmul.f32 %v1132, %v1134
    %v1136 = vadd.f32 %v1132, %v1135
    %vm1137 = vweird.f32 %v1131
    %vm1138 = vweird.f32 %v1132
    %vm1139 = vmor %vm1137, %vm1138
    %v1140 = vsel %vm1139, %v1132, %v1136
    %v1141 = vand.u32 2147483647, %v1131
    %vm1142 = vcmp.eq.f32.partialorder %v1141, 8.507059e+37
    %v1143 = vand.u32 %v1131, 2147483648
    %v1144 = vor.u32 1.1754944e-38, %v1143
    %v1145 = vsel %vm1142, %v1144, %v1140
    %v1146 = vmul.f32 1.0, %v1145
    %v1147 = vtanh.pop %v1126
    %v1148 = vmul.f32 %v1146, %v1024
    %1150 = vrot.lane.b32.xlu0 %v1147, 64
    %v1151 = vpop.permute.xlu0 %1150
    %v1153 = vmul.f32 %v1146, %v1151
    %1155 = vrot.lane.b32.xlu0 %v1153, 32
    %v1156 = vpop.permute.xlu0 %1155
    %v1158 = vadd.f32 %v1148, %v1156
    %v1159 = vtanh.pop %v1158
    %1161 = vrot.lane.b32.xlu0 %v1159, 64
    %v1162 = vpop.permute.xlu0 %1161
    %v1164 = vmul.f32 %v1146, %v1162
    %1166 = vrot.lane.b32.xlu0 %v1164, 32
    %v1167 = vpop.permute.xlu0 %1166
    %1169 = vst.msk [vmem:[#allocation3] sm:$0x3] %vm225, %v1167
    %1170 = vrot.lane.b32.xlu0 %v1100, 64
    %v1171 = vpop.permute.xlu0 %1170
    %1173 = vst.msk [vmem:[#allocation3] sm:$0x3] %vm230, %v1171
    %v1174 = vld [vmem:[#allocation3] sm:$0x3]
    %v1176 = vsel %vm236, %v1174, 0
    %1178 = vmatpush.msra.mxu0 0.0
    %1179 = vmatpush.msra.mxu0 0.0
    %1180 = vmatpush.msra.mxu0 0.0
    %1181 = vmatpush.msra.mxu0 0.0
    %1182 = vmatpush.msra.mxu0 0.0
    %1183 = vmatpush.msra.mxu0 0.0
    %1184 = vmatpush.msra.mxu0 0.0
    %1185 = vmatpush.msra.mxu0 0.0
    %1186 = vmatpush.msra.mxu0 %v162
    %1187 = vmatpush.msra.mxu0 %v161
    %1188 = vmatpush.msra.mxu0 %v160
    %1189 = vmatpush.msra.mxu0 %v159
    %1190 = vmatpush.msra.mxu0 %v158
    %1191 = vmatpush.msra.mxu0 %v157
    %1192 = vmatpush.msra.mxu0 %v156
    %1193 = vmatpush.msra.mxu0 %v155
    %1194 = vmatmul.f32.gmra.mxu0 %v1176
    %v1195 = vpop.f32.mrf.mxu0
    %v1196 = vadd.f32 %v234, %v1195
    %1197 = vdwg.mxu0
    %v1198 = vxor.u32 %v1196, 2147483648
    %v1199 = vmul.f32 %v1198, 1.442695
    %v1200 = vpow.pop %v1199
    %v1201 = vadd.f32 %v1200, 1.0
    %v1202 = vrcp.pop %v1201
    %v1203 = vmul.f32 %v1201, %v1202
    %v1204 = vsub.f32 1.0, %v1203
    %v1205 = vmul.f32 %v1202, %v1204
    %v1206 = vadd.f32 %v1202, %v1205
    %vm1207 = vweird.f32 %v1201
    %vm1208 = vweird.f32 %v1202
    %vm1209 = vmor %vm1207, %vm1208
    %v1210 = vsel %vm1209, %v1202, %v1206
    %v1211 = vand.u32 2147483647, %v1201
    %vm1212 = vcmp.eq.f32.partialorder %v1211, 8.507059e+37
    %v1213 = vand.u32 %v1201, 2147483648
    %v1214 = vor.u32 1.1754944e-38, %v1213
    %v1215 = vsel %vm1212, %v1214, %v1210
    %v1216 = vmul.f32 1.0, %v1215
    %v1217 = vtanh.pop %v1196
    %v1218 = vmul.f32 %v1216, %v1094
    %1220 = vrot.lane.b32.xlu0 %v1217, 64
    %v1221 = vpop.permute.xlu0 %1220
    %v1223 = vmul.f32 %v1216, %v1221
    %1225 = vrot.lane.b32.xlu0 %v1223, 32
    %v1226 = vpop.permute.xlu0 %1225
    %v1228 = vadd.f32 %v1218, %v1226
    %v1229 = vtanh.pop %v1228
    %1231 = vrot.lane.b32.xlu0 %v1229, 64
    %v1232 = vpop.permute.xlu0 %1231
    %v1234 = vmul.f32 %v1216, %v1232
    %1236 = vrot.lane.b32.xlu0 %v1234, 32
    %v1237 = vpop.permute.xlu0 %1236
    %1239 = vst.msk [vmem:[#allocation2 + $0xe] sm:$0x3] %vm225, %v1237
    %v1240 = vld [vmem:[#allocation2] sm:$0xff]
    %v1241 = vld [vmem:[#allocation2 + $0x8] sm:$0xff]
    %v1242 = vld [vmem:[#allocation9] sm:$0xff]
    %v1243 = vld [vmem:[#allocation9 + $0x8] sm:$0xff]
    %v1244 = vld [vmem:[#allocation9 + $0x10] sm:$0xff]
    %v1245 = vld [vmem:[#allocation9 + $0x18] sm:$0xff]
    %v1246 = vld [vmem:[%s9] sm:$0x1]
    %v1248 = vperm.slane %v1246, 0
    %v1251 = vsel %vm127, %v1240, 0
    %v1254 = vsel %vm127, %v1241, 0
    %1256 = vmatpush.msra.mxu0 0.0
    %1257 = vmatpush.msra.mxu0 0.0
    %1258 = vmatpush.msra.mxu0 0.0
    %1259 = vmatpush.msra.mxu0 0.0
    %1260 = vmatpush.msra.mxu0 0.0
    %1261 = vmatpush.msra.mxu0 0.0
    %1262 = vmatpush.msra.mxu0 0.0
    %1263 = vmatpush.msra.mxu0 0.0
    %1264 = vmatpush.msra.mxu0 0.0
    %1265 = vmatpush.msra.mxu0 0.0
    %1266 = vmatpush.msra.mxu0 0.0
    %1267 = vmatpush.msra.mxu0 0.0
    %1268 = vmatpush.msra.mxu0 %v1245
    %1269 = vmatpush.msra.mxu0 %v1244
    %1270 = vmatpush.msra.mxu0 %v1243
    %1271 = vmatpush.msra.mxu0 %v1242
    %1272 = vmatmul.f32.gmra.mxu0 %v1251
    %v1273 = vpop.f32.mrf.mxu0
    %v1274 = vadd.f32 %v1248, %v1273
    %1275 = vmatmul.f32.gmra.mxu0 %v1254
    %v1276 = vpop.f32.mrf.mxu0
    %v1277 = vadd.f32 %v1248, %v1276
    %1278 = vdwg.mxu0
    %v1279 = vmax.f32 %v1274, 0.0
    %v1280 = vmax.f32 %v1277, 0.0
    %v1281 = vld [vmem:[%s10] sm:$0xff]
    %v1282 = vld [vmem:[%s10 + $0x8] sm:$0xff]
    %v1283 = vld [vmem:[%s10 + $0x10] sm:$0xff]
    %v1284 = vld [vmem:[%s10 + $0x18] sm:$0xff]
    %v1285 = vld [vmem:[%s11] sm:$0x1]
    %v1287 = vperm.slane %v1285, 0
    %v1290 = vsel %vm127, %v1279, 0
    %v1293 = vsel %vm127, %v1280, 0
    %1295 = vmatpush.msra.mxu0 0.0
    %1296 = vmatpush.msra.mxu0 0.0
    %1297 = vmatpush.msra.mxu0 0.0
    %1298 = vmatpush.msra.mxu0 0.0
    %1299 = vmatpush.msra.mxu0 0.0
    %1300 = vmatpush.msra.mxu0 0.0
    %1301 = vmatpush.msra.mxu0 0.0
    %1302 = vmatpush.msra.mxu0 0.0
    %1303 = vmatpush.msra.mxu0 0.0
    %1304 = vmatpush.msra.mxu0 0.0
    %1305 = vmatpush.msra.mxu0 0.0
    %1306 = vmatpush.msra.mxu0 0.0
    %1307 = vmatpush.msra.mxu0 %v1284
    %1308 = vmatpush.msra.mxu0 %v1283
    %1309 = vmatpush.msra.mxu0 %v1282
    %1310 = vmatpush.msra.mxu0 %v1281
    %1311 = vmatmul.f32.gmra.mxu0 %v1290
    %v1312 = vpop.f32.mrf.mxu0
    %v1313 = vadd.f32 %v1287, %v1312
    %1314 = vmatmul.f32.gmra.mxu0 %v1293
    %v1315 = vpop.f32.mrf.mxu0
    %v1316 = vadd.f32 %v1287, %v1315
    %1317 = vdwg.mxu0
    %vm1318 = vcmask 130048
    %1319 = vst.msk [vmem:[#allocation10] sm:$0xff] %vm1318, %v1313
    %1320 = vst.msk [vmem:[#allocation10 + $0x8] sm:$0xff] %vm1318, %v1316
    // Predicated region
    $region62: #{tpu_custom_call.1} parent=1 // pred_check
      _
    $region63: #{tpu_custom_call.1} parent=1 // pred_check_branch
      %1322 = sbr.rel (0) target = $region65
    $region64: #{tpu_custom_call.1} parent=1 // pred_region
      %1324 = vsyncadd [#allocation6], 0
      %s1325 = sshll.u32 [#allocation10], 4
      %s1326 = int_to_ptr.vmem [resolvable:$true] %s1325
      %s1327 = sshll.u32 %s12, 4
      %s1328 = int_to_ptr.hbm [resolvable:$true] %s1327
      %1333 = dma.vmem_to_hbm [thread:$0]  %s1326, 256, %s1328, [#allocation6], 128, 128, 8
    $region65: #{tpu_custom_call.1} parent=1 // pred_fallthru
      _
    // Predicated region
    $region66: #{tpu_custom_call.1} parent=1 // pred_check
      _
    $region67: #{tpu_custom_call.1} parent=1 // pred_check_branch
      %1335 = sbr.rel (0) target = $region69
    $region68: #{tpu_custom_call.1} parent=1 // pred_region
      %1337 = dma.done [#allocation6], 256
    $region69: #{tpu_custom_call.1} parent=1 // pred_fallthru
      _
    %1338 = vsyncpa [#allocation5], 1
    %1339 = vsyncpa [#allocation8], 1
    %1340 = vsyncpa [#allocation6], 1

</llo_original>
